<compile_context>
chip_gen: v7x
topology: tpu7x:2x2x1
jax: 0.10.0
libtpu: 0.0.40
codegen_flags: <defaults>
</compile_context>

<pallas_src>
import functools

import jax
import jax.numpy as jnp
from jax.experimental import pallas as pl
from jax.experimental.pallas import tpu as pltpu

BBLK = 8  # batch rows per grid step == one sublane tile


# ----------------------------------------------------------------------------
# Pallas kernel: tanh(emb) -> 2-layer LSTM -> concat(h,c) -> tanh -> fc
# ----------------------------------------------------------------------------
def question_encoder_kernel(x_ref,      # (S*BBLK, E)     time-major block, pre-tanh
                            wslab_ref,  # (E+4H+2, LW)    [wih0_t; fcw_pad; b0; fcb_pad]
                            wf_ref,     # (2H+1, 8H)      [[wih1,whh0],[whh1,0],[b1,0]]
                            out_ref,    # (BBLK, Q_pad)
                            *, seq_len, hidden, emb_size, q_pad):
    f32 = jnp.float32
    S, H, E, Qp = seq_len, hidden, emb_size, q_pad
    H2, H4 = 2 * H, 4 * H
    Bb = out_ref.shape[0]

    # ---- layer-0 input projection, hoisted out of the recurrence ----
    wih0 = wslab_ref[0:E, 0:H4]                                   # (E, 4H)
    b0 = wslab_ref[E + H4:E + H4 + 1, 0:H4]                       # (1, 4H)
    x_all = jnp.tanh(x_ref[...])                                  # (S*Bb, E)
    xp = jnp.dot(x_all, wih0, preferred_element_type=f32) + b0    # (S*Bb, 4H)

    # ---- fused step weight / bias, loaded + broadcast once (not per step) ----
    w_fused = wf_ref[0:H2, :]                                     # (2H, 8H)
    b1f = jnp.broadcast_to(wf_ref[H2:H2 + 1, :], (Bb, 2 * H4))    # (Bb, 8H)

    def gate_split(gates):                                        # gate order [i, f, o | g]
        sg = jax.nn.sigmoid(gates[:, 0:3 * H])                    # sigmoid lanes only
        g = jnp.tanh(gates[:, 3 * H:H4])                          # tanh lanes only
        return sg[:, 0:H], sg[:, H:2 * H], sg[:, 2 * H:3 * H], g

    # ---- LSTM state carried in vregs, zero initial state ----
    h0 = jnp.zeros((Bb, H), f32)
    h1 = jnp.zeros((Bb, H), f32)
    c0 = jnp.zeros((Bb, H), f32)
    c1 = jnp.zeros((Bb, H), f32)
    rec0 = jnp.zeros((Bb, H4), f32)                               # h0(-1) @ whh0 == 0

    # S is a trace-time constant -> static unroll (full LLO scheduling visibility).
    # TODO(synk): if S or H grow, switch to lax.fori_loop(..., unroll=True) to bound vregs.
    for t in range(S):
        # layer 0: recurrent term was produced by the previous step's fused dot
        gates0 = xp[t * Bb:(t + 1) * Bb] + rec0
        i0, f0, o0, g0 = gate_split(gates0)
        c0 = f0 * c0 + i0 * g0
        h0 = o0 * jnp.tanh(c0)

        # one 256-wide MXU push per step:
        #   lanes 0:4H  = layer-1 gates(t)        (h0 @ wih1 + h1 @ whh1 + b1)
        #   lanes 4H:8H = layer-0 recurrence(t+1) (h0 @ whh0)
        fused = jnp.dot(jnp.concatenate([h0, h1], axis=1), w_fused,
                        preferred_element_type=f32) + b1f
        gates1 = fused[:, 0:H4]
        rec0 = fused[:, H4:2 * H4]
        i1, f1, o1, g1 = gate_split(gates1)
        c1 = f1 * c1 + i1 * g1
        h1 = o1 * jnp.tanh(c1)

    # cat((hidden, cell), 2) -> transpose(0,1) -> reshape(B,-1) => [h0, c0, h1, c1]
    feat = jnp.tanh(jnp.concatenate([h0, c0, h1, c1], axis=1))    # (Bb, 4H)
    fcw = wslab_ref[E:E + H4, 0:Qp]                               # (4H, Qp)
    fcb = wslab_ref[E + H4 + 1:E + H4 + 2, 0:Qp]                  # (1, Qp)
    out_ref[...] = jnp.dot(feat, fcw, preferred_element_type=f32) + fcb


# ----------------------------------------------------------------------------
# Wrapper: embedding gather, padding, gate reordering, weight fusion, packing
# ----------------------------------------------------------------------------
def question_encoder_forward(question, params):
    # Embedding lookup (gather) stays in plain XLA glue.
    emb = jnp.take(params["embedding"], question, axis=0)          # (B, S, E)
    B, S, E = emb.shape
    H = params["whh0_t"].shape[0]
    Q = params["fcw_t"].shape[1]
    H4 = 4 * H

    n_blk = -(-B // BBLK)
    B_pad = n_blk * BBLK
    Q_pad = max(128, -(-Q // 128) * 128)
    LW = max(H4, Q_pad)

    # time-major, batch padded to a sublane multiple, flattened per batch block:
    # row (blk, t, j) holds token t of question blk*BBLK + j.
    x = jnp.transpose(emb, (1, 0, 2)).astype(jnp.float32)          # (S, B, E)
    x = jnp.pad(x, ((0, 0), (0, B_pad - B), (0, 0)))               # (S, B_pad, E)
    x = x.reshape(S, n_blk, BBLK, E).transpose(1, 0, 2, 3).reshape(n_blk * S * BBLK, E)

    # gate order i,f,g,o -> i,f,o,g (all sigmoid lanes first, tanh lanes last)
    def reorder(w):
        return jnp.concatenate([w[..., :2 * H], w[..., 3 * H:], w[..., 2 * H:3 * H]],
                               axis=-1)

    wih0, whh0 = reorder(params["wih0_t"]), reorder(params["whh0_t"])
    wih1, whh1 = reorder(params["wih1_t"]), reorder(params["whh1_t"])
    b0, b1 = reorder(params["b0"]), reorder(params["b1"])

    # fused per-step weight: [h0, h1] @ Wf = [layer-1 gates | layer-0 recurrence]
    zeros_h = jnp.zeros((H, H4), jnp.float32)
    w_fused = jnp.concatenate([jnp.concatenate([wih1, whh0], axis=1),
                               jnp.concatenate([whh1, zeros_h], axis=1)], axis=0)
    wf_slab = jnp.concatenate(
        [w_fused, jnp.concatenate([b1, jnp.zeros((1, H4), jnp.float32)], axis=1)],
        axis=0)                                                    # (2H+1, 8H)

    def pad_cols(a):
        return jnp.pad(a, ((0, 0), (0, LW - a.shape[1])))

    fcw = pad_cols(jnp.pad(params["fcw_t"], ((0, 0), (0, Q_pad - Q))))
    fcb = pad_cols(jnp.pad(params["fcb"], ((0, 0), (0, Q_pad - Q))))
    wslab = jnp.concatenate([pad_cols(wih0), fcw, pad_cols(b0), fcb], axis=0)

    kernel = pl.pallas_call(
        functools.partial(question_encoder_kernel,
                          seq_len=S, hidden=H, emb_size=E, q_pad=Q_pad),
        out_shape=jax.ShapeDtypeStruct((B_pad, Q_pad), jnp.float32),
        grid=(n_blk,),
        in_specs=[
            pl.BlockSpec((S * BBLK, E), lambda b: (b, 0)),         # per-block activations
            pl.BlockSpec(wslab.shape, lambda b: (0, 0)),           # resident weight slab
            pl.BlockSpec(wf_slab.shape, lambda b: (0, 0)),         # resident fused weight
        ],
        out_specs=pl.BlockSpec((BBLK, Q_pad), lambda b: (b, 0)),
        compiler_params=pltpu.CompilerParams(
            dimension_semantics=("parallel",)),                    # v7x: 2 TCs split blocks
    )
    out = kernel(x, wslab, wf_slab)
    return out[:B, :Q]


# ----------------------------------------------------------------------------
# Deterministic parameter init (shapes per nn.Module __init__), PyTorch layout
# ----------------------------------------------------------------------------
def init_params(key, vocab, emb_size, hidden, q_emb):
    ks = jax.random.split(key, 12)
    s = 1.0 / jnp.sqrt(hidden)
    u = lambda k, shape: jax.random.uniform(k, shape, jnp.float32, -s, s)
    embedding = jax.random.normal(ks[0], (vocab, emb_size), jnp.float32)
    w_ih0 = u(ks[1], (4 * hidden, emb_size))
    w_hh0 = u(ks[2], (4 * hidden, hidden))
    b_ih0 = u(ks[3], (4 * hidden,))
    b_hh0 = u(ks[4], (4 * hidden,))
    w_ih1 = u(ks[5], (4 * hidden, hidden))
    w_hh1 = u(ks[6], (4 * hidden, hidden))
    b_ih1 = u(ks[7], (4 * hidden,))
    b_hh1 = u(ks[8], (4 * hidden,))
    fc_w = u(ks[9], (q_emb, 4 * hidden))   # Linear(2*L*H, Q) with L=2 -> in = 4H
    fc_b = u(ks[10], (q_emb,))
    return dict(
        embedding=embedding,
        wih0_t=w_ih0.T, whh0_t=w_hh0.T, b0=(b_ih0 + b_hh0).reshape(1, -1),
        wih1_t=w_ih1.T, whh1_t=w_hh1.T, b1=(b_ih1 + b_hh1).reshape(1, -1),
        fcw_t=fc_w.T, fcb=fc_b.reshape(1, -1),
    )


# ----------------------------------------------------------------------------
# Pure-JAX reference (mirrors the PyTorch forward exactly; unpermuted params)
# ----------------------------------------------------------------------------
def reference_forward(question, params):
    emb = jnp.take(params["embedding"], question, axis=0)          # (B, S, E)
    x = jnp.tanh(emb)
    x = jnp.transpose(x, (1, 0, 2))                                # (S, B, E)
    S, B, _ = x.shape
    H = params["whh0_t"].shape[0]
    h0 = jnp.zeros((B, H)); c0 = jnp.zeros((B, H))
    h1 = jnp.zeros((B, H)); c1 = jnp.zeros((B, H))
    for t in range(S):
        g = x[t] @ params["wih0_t"] + h0 @ params["whh0_t"] + params["b0"]
        i, f, gg, o = (jax.nn.sigmoid(g[:, :H]), jax.nn.sigmoid(g[:, H:2 * H]),
                       jnp.tanh(g[:, 2 * H:3 * H]), jax.nn.sigmoid(g[:, 3 * H:]))
        c0 = f * c0 + i * gg
        h0 = o * jnp.tanh(c0)
        g = h0 @ params["wih1_t"] + h1 @ params["whh1_t"] + params["b1"]
        i, f, gg, o = (jax.nn.sigmoid(g[:, :H]), jax.nn.sigmoid(g[:, H:2 * H]),
                       jnp.tanh(g[:, 2 * H:3 * H]), jax.nn.sigmoid(g[:, 3 * H:]))
        c1 = f * c1 + i * gg
        h1 = o * jnp.tanh(c1)
    feat = jnp.tanh(jnp.concatenate([h0, c0, h1, c1], axis=1))
    return feat @ params["fcw_t"] + params["fcb"]


if __name__ == "__main__":
    # Small shapes consistent with the module: batch=2, seq=8, vocab=50,
    # word_embedding_size=32, num_hidden_units=32, num_lstm_layers=2 (fixed),
    # question_embedding_size=64.
    VOCAB, EMB, HID, QEMB = 50, 32, 32, 64
    BATCH, SEQ = 2, 8

    key = jax.random.PRNGKey(0)
    k_params, k_q = jax.random.split(key)
    params = init_params(k_params, VOCAB, EMB, HID, QEMB)
    question = jax.random.randint(k_q, (BATCH, SEQ), 0, VOCAB, dtype=jnp.int32)

    out = question_encoder_forward(question, params)
    out = jax.block_until_ready(out)

    ref = reference_forward(question, params)
    assert out.shape == (BATCH, QEMB)
    # f32 throughout -> tight tolerance (catches layout / permutation regressions).
    assert jnp.allclose(out, ref, rtol=1e-4, atol=1e-4), "mismatch vs. JAX reference"

    print("KERNEL_OK")
</pallas_src>

<mosaic_0001>
module attributes {stable_mosaic.version = 11 : i64} {
  func.func @question_encoder_kernel(%arg0: i32, %arg1: memref<64x32xf32, #tpu.memory_space<vmem>>, %arg2: memref<162x128xf32, #tpu.memory_space<vmem>>, %arg3: memref<65x256xf32, #tpu.memory_space<vmem>>, %arg4: memref<8x128xf32, #tpu.memory_space<vmem>>) attributes {dimension_semantics = [#tpu.dimension_semantics<parallel>], iteration_bounds = array<i64: 1>, scalar_prefetch = 0 : i64, scratch_operands = 0 : i64, tpu.core_type = #tpu.core_type<tc>, window_params = [{transform_indices = @transform_0, window_bounds = array<i64: 64, 32>}, {pipeline_mode = #tpu.pipeline_mode<synchronous>, transform_indices = @transform_1, window_bounds = array<i64: 162, 128>}, {pipeline_mode = #tpu.pipeline_mode<synchronous>, transform_indices = @transform_2, window_bounds = array<i64: 65, 256>}, {transform_indices = @transform_3, window_bounds = array<i64: 8, 128>}]} {
    %c0 = arith.constant 0 : index
    %c0_0 = arith.constant 0 : index
    %0 = vector.load %arg2[%c0, %c0_0] : memref<162x128xf32, #tpu.memory_space<vmem>>, vector<32x128xf32>
    %c160 = arith.constant 160 : index
    %c0_1 = arith.constant 0 : index
    %1 = vector.load %arg2[%c160, %c0_1] : memref<162x128xf32, #tpu.memory_space<vmem>>, vector<1x128xf32>
    %c0_2 = arith.constant 0 : index
    %c0_3 = arith.constant 0 : index
    %2 = vector.load %arg1[%c0_2, %c0_3] : memref<64x32xf32, #tpu.memory_space<vmem>>, vector<64x32xf32>
    %3 = math.tanh %2 : vector<64x32xf32>
    %cst = arith.constant dense<0.000000e+00> : vector<64x128xf32>
    %4 = tpu.matmul %3, %0, %cst {dimension_numbers = #tpu.dot_dimension_numbers<[1], [0], [0], [1], [0, 0, 1, 1], [], []>} : vector<64x32xf32>, vector<32x128xf32>, vector<64x128xf32> -> vector<64x128xf32>
    %5 = vector.broadcast %1 : vector<1x128xf32> to vector<64x128xf32>
    %6 = arith.addf %4, %5 : vector<64x128xf32>
    %c0_4 = arith.constant 0 : index
    %c0_5 = arith.constant 0 : index
    %7 = vector.load %arg3[%c0_4, %c0_5] : memref<65x256xf32, #tpu.memory_space<vmem>>, vector<64x256xf32>
    %c64 = arith.constant 64 : index
    %c0_6 = arith.constant 0 : index
    %8 = vector.load %arg3[%c64, %c0_6] : memref<65x256xf32, #tpu.memory_space<vmem>>, vector<1x256xf32>
    %9 = vector.shape_cast %8 : vector<1x256xf32> to vector<1x256xf32>
    %10 = vector.broadcast %9 : vector<1x256xf32> to vector<8x256xf32>
    %cst_7 = arith.constant 0.000000e+00 : f32
    %11 = vector.broadcast %cst_7 : f32 to vector<8x32xf32>
    %cst_8 = arith.constant 0.000000e+00 : f32
    %12 = vector.broadcast %cst_8 : f32 to vector<8x32xf32>
    %cst_9 = arith.constant 0.000000e+00 : f32
    %13 = vector.broadcast %cst_9 : f32 to vector<8x32xf32>
    %cst_10 = arith.constant 0.000000e+00 : f32
    %14 = vector.broadcast %cst_10 : f32 to vector<8x128xf32>
    %15 = vector.extract_strided_slice %6 {offsets = [0, 0], sizes = [8, 128], strides = [1, 1]} : vector<64x128xf32> to vector<8x128xf32>
    %16 = arith.addf %15, %14 : vector<8x128xf32>
    %17 = vector.extract_strided_slice %16 {offsets = [0, 0], sizes = [8, 96], strides = [1, 1]} : vector<8x128xf32> to vector<8x96xf32>
    %18 = arith.negf %17 : vector<8x96xf32>
    %19 = math.exp %18 : vector<8x96xf32>
    %cst_11 = arith.constant 1.000000e+00 : f32
    %20 = vector.broadcast %cst_11 : f32 to vector<8x96xf32>
    %21 = arith.addf %20, %19 : vector<8x96xf32>
    %22 = arith.divf %20, %21 : vector<8x96xf32>
    %23 = vector.extract_strided_slice %16 {offsets = [0, 96], sizes = [8, 32], strides = [1, 1]} : vector<8x128xf32> to vector<8x32xf32>
    %24 = math.tanh %23 : vector<8x32xf32>
    %25 = vector.extract_strided_slice %22 {offsets = [0, 0], sizes = [8, 32], strides = [1, 1]} : vector<8x96xf32> to vector<8x32xf32>
    %26 = vector.extract_strided_slice %22 {offsets = [0, 32], sizes = [8, 32], strides = [1, 1]} : vector<8x96xf32> to vector<8x32xf32>
    %27 = vector.extract_strided_slice %22 {offsets = [0, 64], sizes = [8, 32], strides = [1, 1]} : vector<8x96xf32> to vector<8x32xf32>
    %28 = arith.mulf %26, %12 : vector<8x32xf32>
    %29 = arith.mulf %25, %24 : vector<8x32xf32>
    %30 = arith.addf %28, %29 : vector<8x32xf32>
    %31 = math.tanh %30 : vector<8x32xf32>
    %32 = arith.mulf %27, %31 : vector<8x32xf32>
    %33 = tpu.concatenate %32, %11 in 1 : vector<8x32xf32>, vector<8x32xf32> -> vector<8x64xf32>
    %cst_12 = arith.constant dense<0.000000e+00> : vector<8x256xf32>
    %34 = tpu.matmul %33, %7, %cst_12 {dimension_numbers = #tpu.dot_dimension_numbers<[1], [0], [0], [1], [0, 0, 1, 1], [], []>} : vector<8x64xf32>, vector<64x256xf32>, vector<8x256xf32> -> vector<8x256xf32>
    %35 = arith.addf %34, %10 : vector<8x256xf32>
    %36 = vector.extract_strided_slice %35 {offsets = [0, 0], sizes = [8, 128], strides = [1, 1]} : vector<8x256xf32> to vector<8x128xf32>
    %37 = vector.extract_strided_slice %35 {offsets = [0, 128], sizes = [8, 128], strides = [1, 1]} : vector<8x256xf32> to vector<8x128xf32>
    %38 = vector.extract_strided_slice %36 {offsets = [0, 0], sizes = [8, 96], strides = [1, 1]} : vector<8x128xf32> to vector<8x96xf32>
    %39 = arith.negf %38 : vector<8x96xf32>
    %40 = math.exp %39 : vector<8x96xf32>
    %cst_13 = arith.constant 1.000000e+00 : f32
    %41 = vector.broadcast %cst_13 : f32 to vector<8x96xf32>
    %42 = arith.addf %41, %40 : vector<8x96xf32>
    %43 = arith.divf %41, %42 : vector<8x96xf32>
    %44 = vector.extract_strided_slice %36 {offsets = [0, 96], sizes = [8, 32], strides = [1, 1]} : vector<8x128xf32> to vector<8x32xf32>
    %45 = math.tanh %44 : vector<8x32xf32>
    %46 = vector.extract_strided_slice %43 {offsets = [0, 0], sizes = [8, 32], strides = [1, 1]} : vector<8x96xf32> to vector<8x32xf32>
    %47 = vector.extract_strided_slice %43 {offsets = [0, 32], sizes = [8, 32], strides = [1, 1]} : vector<8x96xf32> to vector<8x32xf32>
    %48 = vector.extract_strided_slice %43 {offsets = [0, 64], sizes = [8, 32], strides = [1, 1]} : vector<8x96xf32> to vector<8x32xf32>
    %49 = arith.mulf %47, %13 : vector<8x32xf32>
    %50 = arith.mulf %46, %45 : vector<8x32xf32>
    %51 = arith.addf %49, %50 : vector<8x32xf32>
    %52 = math.tanh %51 : vector<8x32xf32>
    %53 = arith.mulf %48, %52 : vector<8x32xf32>
    %54 = vector.extract_strided_slice %6 {offsets = [8, 0], sizes = [8, 128], strides = [1, 1]} : vector<64x128xf32> to vector<8x128xf32>
    %55 = arith.addf %54, %37 : vector<8x128xf32>
    %56 = vector.extract_strided_slice %55 {offsets = [0, 0], sizes = [8, 96], strides = [1, 1]} : vector<8x128xf32> to vector<8x96xf32>
    %57 = arith.negf %56 : vector<8x96xf32>
    %58 = math.exp %57 : vector<8x96xf32>
    %cst_14 = arith.constant 1.000000e+00 : f32
    %59 = vector.broadcast %cst_14 : f32 to vector<8x96xf32>
    %60 = arith.addf %59, %58 : vector<8x96xf32>
    %61 = arith.divf %59, %60 : vector<8x96xf32>
    %62 = vector.extract_strided_slice %55 {offsets = [0, 96], sizes = [8, 32], strides = [1, 1]} : vector<8x128xf32> to vector<8x32xf32>
    %63 = math.tanh %62 : vector<8x32xf32>
    %64 = vector.extract_strided_slice %61 {offsets = [0, 0], sizes = [8, 32], strides = [1, 1]} : vector<8x96xf32> to vector<8x32xf32>
    %65 = vector.extract_strided_slice %61 {offsets = [0, 32], sizes = [8, 32], strides = [1, 1]} : vector<8x96xf32> to vector<8x32xf32>
    %66 = vector.extract_strided_slice %61 {offsets = [0, 64], sizes = [8, 32], strides = [1, 1]} : vector<8x96xf32> to vector<8x32xf32>
    %67 = arith.mulf %65, %30 : vector<8x32xf32>
    %68 = arith.mulf %64, %63 : vector<8x32xf32>
    %69 = arith.addf %67, %68 : vector<8x32xf32>
    %70 = math.tanh %69 : vector<8x32xf32>
    %71 = arith.mulf %66, %70 : vector<8x32xf32>
    %72 = tpu.concatenate %71, %53 in 1 : vector<8x32xf32>, vector<8x32xf32> -> vector<8x64xf32>
    %cst_15 = arith.constant dense<0.000000e+00> : vector<8x256xf32>
    %73 = tpu.matmul %72, %7, %cst_15 {dimension_numbers = #tpu.dot_dimension_numbers<[1], [0], [0], [1], [0, 0, 1, 1], [], []>} : vector<8x64xf32>, vector<64x256xf32>, vector<8x256xf32> -> vector<8x256xf32>
    %74 = arith.addf %73, %10 : vector<8x256xf32>
    %75 = vector.extract_strided_slice %74 {offsets = [0, 0], sizes = [8, 128], strides = [1, 1]} : vector<8x256xf32> to vector<8x128xf32>
    %76 = vector.extract_strided_slice %74 {offsets = [0, 128], sizes = [8, 128], strides = [1, 1]} : vector<8x256xf32> to vector<8x128xf32>
    %77 = vector.extract_strided_slice %75 {offsets = [0, 0], sizes = [8, 96], strides = [1, 1]} : vector<8x128xf32> to vector<8x96xf32>
    %78 = arith.negf %77 : vector<8x96xf32>
    %79 = math.exp %78 : vector<8x96xf32>
    %cst_16 = arith.constant 1.000000e+00 : f32
    %80 = vector.broadcast %cst_16 : f32 to vector<8x96xf32>
    %81 = arith.addf %80, %79 : vector<8x96xf32>
    %82 = arith.divf %80, %81 : vector<8x96xf32>
    %83 = vector.extract_strided_slice %75 {offsets = [0, 96], sizes = [8, 32], strides = [1, 1]} : vector<8x128xf32> to vector<8x32xf32>
    %84 = math.tanh %83 : vector<8x32xf32>
    %85 = vector.extract_strided_slice %82 {offsets = [0, 0], sizes = [8, 32], strides = [1, 1]} : vector<8x96xf32> to vector<8x32xf32>
    %86 = vector.extract_strided_slice %82 {offsets = [0, 32], sizes = [8, 32], strides = [1, 1]} : vector<8x96xf32> to vector<8x32xf32>
    %87 = vector.extract_strided_slice %82 {offsets = [0, 64], sizes = [8, 32], strides = [1, 1]} : vector<8x96xf32> to vector<8x32xf32>
    %88 = arith.mulf %86, %51 : vector<8x32xf32>
    %89 = arith.mulf %85, %84 : vector<8x32xf32>
    %90 = arith.addf %88, %89 : vector<8x32xf32>
    %91 = math.tanh %90 : vector<8x32xf32>
    %92 = arith.mulf %87, %91 : vector<8x32xf32>
    %93 = vector.extract_strided_slice %6 {offsets = [16, 0], sizes = [8, 128], strides = [1, 1]} : vector<64x128xf32> to vector<8x128xf32>
    %94 = arith.addf %93, %76 : vector<8x128xf32>
    %95 = vector.extract_strided_slice %94 {offsets = [0, 0], sizes = [8, 96], strides = [1, 1]} : vector<8x128xf32> to vector<8x96xf32>
    %96 = arith.negf %95 : vector<8x96xf32>
    %97 = math.exp %96 : vector<8x96xf32>
    %cst_17 = arith.constant 1.000000e+00 : f32
    %98 = vector.broadcast %cst_17 : f32 to vector<8x96xf32>
    %99 = arith.addf %98, %97 : vector<8x96xf32>
    %100 = arith.divf %98, %99 : vector<8x96xf32>
    %101 = vector.extract_strided_slice %94 {offsets = [0, 96], sizes = [8, 32], strides = [1, 1]} : vector<8x128xf32> to vector<8x32xf32>
    %102 = math.tanh %101 : vector<8x32xf32>
    %103 = vector.extract_strided_slice %100 {offsets = [0, 0], sizes = [8, 32], strides = [1, 1]} : vector<8x96xf32> to vector<8x32xf32>
    %104 = vector.extract_strided_slice %100 {offsets = [0, 32], sizes = [8, 32], strides = [1, 1]} : vector<8x96xf32> to vector<8x32xf32>
    %105 = vector.extract_strided_slice %100 {offsets = [0, 64], sizes = [8, 32], strides = [1, 1]} : vector<8x96xf32> to vector<8x32xf32>
    %106 = arith.mulf %104, %69 : vector<8x32xf32>
    %107 = arith.mulf %103, %102 : vector<8x32xf32>
    %108 = arith.addf %106, %107 : vector<8x32xf32>
    %109 = math.tanh %108 : vector<8x32xf32>
    %110 = arith.mulf %105, %109 : vector<8x32xf32>
    %111 = tpu.concatenate %110, %92 in 1 : vector<8x32xf32>, vector<8x32xf32> -> vector<8x64xf32>
    %cst_18 = arith.constant dense<0.000000e+00> : vector<8x256xf32>
    %112 = tpu.matmul %111, %7, %cst_18 {dimension_numbers = #tpu.dot_dimension_numbers<[1], [0], [0], [1], [0, 0, 1, 1], [], []>} : vector<8x64xf32>, vector<64x256xf32>, vector<8x256xf32> -> vector<8x256xf32>
    %113 = arith.addf %112, %10 : vector<8x256xf32>
    %114 = vector.extract_strided_slice %113 {offsets = [0, 0], sizes = [8, 128], strides = [1, 1]} : vector<8x256xf32> to vector<8x128xf32>
    %115 = vector.extract_strided_slice %113 {offsets = [0, 128], sizes = [8, 128], strides = [1, 1]} : vector<8x256xf32> to vector<8x128xf32>
    %116 = vector.extract_strided_slice %114 {offsets = [0, 0], sizes = [8, 96], strides = [1, 1]} : vector<8x128xf32> to vector<8x96xf32>
    %117 = arith.negf %116 : vector<8x96xf32>
    %118 = math.exp %117 : vector<8x96xf32>
    %cst_19 = arith.constant 1.000000e+00 : f32
    %119 = vector.broadcast %cst_19 : f32 to vector<8x96xf32>
    %120 = arith.addf %119, %118 : vector<8x96xf32>
    %121 = arith.divf %119, %120 : vector<8x96xf32>
    %122 = vector.extract_strided_slice %114 {offsets = [0, 96], sizes = [8, 32], strides = [1, 1]} : vector<8x128xf32> to vector<8x32xf32>
    %123 = math.tanh %122 : vector<8x32xf32>
    %124 = vector.extract_strided_slice %121 {offsets = [0, 0], sizes = [8, 32], strides = [1, 1]} : vector<8x96xf32> to vector<8x32xf32>
    %125 = vector.extract_strided_slice %121 {offsets = [0, 32], sizes = [8, 32], strides = [1, 1]} : vector<8x96xf32> to vector<8x32xf32>
    %126 = vector.extract_strided_slice %121 {offsets = [0, 64], sizes = [8, 32], strides = [1, 1]} : vector<8x96xf32> to vector<8x32xf32>
    %127 = arith.mulf %125, %90 : vector<8x32xf32>
    %128 = arith.mulf %124, %123 : vector<8x32xf32>
    %129 = arith.addf %127, %128 : vector<8x32xf32>
    %130 = math.tanh %129 : vector<8x32xf32>
    %131 = arith.mulf %126, %130 : vector<8x32xf32>
    %132 = vector.extract_strided_slice %6 {offsets = [24, 0], sizes = [8, 128], strides = [1, 1]} : vector<64x128xf32> to vector<8x128xf32>
    %133 = arith.addf %132, %115 : vector<8x128xf32>
    %134 = vector.extract_strided_slice %133 {offsets = [0, 0], sizes = [8, 96], strides = [1, 1]} : vector<8x128xf32> to vector<8x96xf32>
    %135 = arith.negf %134 : vector<8x96xf32>
    %136 = math.exp %135 : vector<8x96xf32>
    %cst_20 = arith.constant 1.000000e+00 : f32
    %137 = vector.broadcast %cst_20 : f32 to vector<8x96xf32>
    %138 = arith.addf %137, %136 : vector<8x96xf32>
    %139 = arith.divf %137, %138 : vector<8x96xf32>
    %140 = vector.extract_strided_slice %133 {offsets = [0, 96], sizes = [8, 32], strides = [1, 1]} : vector<8x128xf32> to vector<8x32xf32>
    %141 = math.tanh %140 : vector<8x32xf32>
    %142 = vector.extract_strided_slice %139 {offsets = [0, 0], sizes = [8, 32], strides = [1, 1]} : vector<8x96xf32> to vector<8x32xf32>
    %143 = vector.extract_strided_slice %139 {offsets = [0, 32], sizes = [8, 32], strides = [1, 1]} : vector<8x96xf32> to vector<8x32xf32>
    %144 = vector.extract_strided_slice %139 {offsets = [0, 64], sizes = [8, 32], strides = [1, 1]} : vector<8x96xf32> to vector<8x32xf32>
    %145 = arith.mulf %143, %108 : vector<8x32xf32>
    %146 = arith.mulf %142, %141 : vector<8x32xf32>
    %147 = arith.addf %145, %146 : vector<8x32xf32>
    %148 = math.tanh %147 : vector<8x32xf32>
    %149 = arith.mulf %144, %148 : vector<8x32xf32>
    %150 = tpu.concatenate %149, %131 in 1 : vector<8x32xf32>, vector<8x32xf32> -> vector<8x64xf32>
    %cst_21 = arith.constant dense<0.000000e+00> : vector<8x256xf32>
    %151 = tpu.matmul %150, %7, %cst_21 {dimension_numbers = #tpu.dot_dimension_numbers<[1], [0], [0], [1], [0, 0, 1, 1], [], []>} : vector<8x64xf32>, vector<64x256xf32>, vector<8x256xf32> -> vector<8x256xf32>
    %152 = arith.addf %151, %10 : vector<8x256xf32>
    %153 = vector.extract_strided_slice %152 {offsets = [0, 0], sizes = [8, 128], strides = [1, 1]} : vector<8x256xf32> to vector<8x128xf32>
    %154 = vector.extract_strided_slice %152 {offsets = [0, 128], sizes = [8, 128], strides = [1, 1]} : vector<8x256xf32> to vector<8x128xf32>
    %155 = vector.extract_strided_slice %153 {offsets = [0, 0], sizes = [8, 96], strides = [1, 1]} : vector<8x128xf32> to vector<8x96xf32>
    %156 = arith.negf %155 : vector<8x96xf32>
    %157 = math.exp %156 : vector<8x96xf32>
    %cst_22 = arith.constant 1.000000e+00 : f32
    %158 = vector.broadcast %cst_22 : f32 to vector<8x96xf32>
    %159 = arith.addf %158, %157 : vector<8x96xf32>
    %160 = arith.divf %158, %159 : vector<8x96xf32>
    %161 = vector.extract_strided_slice %153 {offsets = [0, 96], sizes = [8, 32], strides = [1, 1]} : vector<8x128xf32> to vector<8x32xf32>
    %162 = math.tanh %161 : vector<8x32xf32>
    %163 = vector.extract_strided_slice %160 {offsets = [0, 0], sizes = [8, 32], strides = [1, 1]} : vector<8x96xf32> to vector<8x32xf32>
    %164 = vector.extract_strided_slice %160 {offsets = [0, 32], sizes = [8, 32], strides = [1, 1]} : vector<8x96xf32> to vector<8x32xf32>
    %165 = vector.extract_strided_slice %160 {offsets = [0, 64], sizes = [8, 32], strides = [1, 1]} : vector<8x96xf32> to vector<8x32xf32>
    %166 = arith.mulf %164, %129 : vector<8x32xf32>
    %167 = arith.mulf %163, %162 : vector<8x32xf32>
    %168 = arith.addf %166, %167 : vector<8x32xf32>
    %169 = math.tanh %168 : vector<8x32xf32>
    %170 = arith.mulf %165, %169 : vector<8x32xf32>
    %171 = vector.extract_strided_slice %6 {offsets = [32, 0], sizes = [8, 128], strides = [1, 1]} : vector<64x128xf32> to vector<8x128xf32>
    %172 = arith.addf %171, %154 : vector<8x128xf32>
    %173 = vector.extract_strided_slice %172 {offsets = [0, 0], sizes = [8, 96], strides = [1, 1]} : vector<8x128xf32> to vector<8x96xf32>
    %174 = arith.negf %173 : vector<8x96xf32>
    %175 = math.exp %174 : vector<8x96xf32>
    %cst_23 = arith.constant 1.000000e+00 : f32
    %176 = vector.broadcast %cst_23 : f32 to vector<8x96xf32>
    %177 = arith.addf %176, %175 : vector<8x96xf32>
    %178 = arith.divf %176, %177 : vector<8x96xf32>
    %179 = vector.extract_strided_slice %172 {offsets = [0, 96], sizes = [8, 32], strides = [1, 1]} : vector<8x128xf32> to vector<8x32xf32>
    %180 = math.tanh %179 : vector<8x32xf32>
    %181 = vector.extract_strided_slice %178 {offsets = [0, 0], sizes = [8, 32], strides = [1, 1]} : vector<8x96xf32> to vector<8x32xf32>
    %182 = vector.extract_strided_slice %178 {offsets = [0, 32], sizes = [8, 32], strides = [1, 1]} : vector<8x96xf32> to vector<8x32xf32>
    %183 = vector.extract_strided_slice %178 {offsets = [0, 64], sizes = [8, 32], strides = [1, 1]} : vector<8x96xf32> to vector<8x32xf32>
    %184 = arith.mulf %182, %147 : vector<8x32xf32>
    %185 = arith.mulf %181, %180 : vector<8x32xf32>
    %186 = arith.addf %184, %185 : vector<8x32xf32>
    %187 = math.tanh %186 : vector<8x32xf32>
    %188 = arith.mulf %183, %187 : vector<8x32xf32>
    %189 = tpu.concatenate %188, %170 in 1 : vector<8x32xf32>, vector<8x32xf32> -> vector<8x64xf32>
    %cst_24 = arith.constant dense<0.000000e+00> : vector<8x256xf32>
    %190 = tpu.matmul %189, %7, %cst_24 {dimension_numbers = #tpu.dot_dimension_numbers<[1], [0], [0], [1], [0, 0, 1, 1], [], []>} : vector<8x64xf32>, vector<64x256xf32>, vector<8x256xf32> -> vector<8x256xf32>
    %191 = arith.addf %190, %10 : vector<8x256xf32>
    %192 = vector.extract_strided_slice %191 {offsets = [0, 0], sizes = [8, 128], strides = [1, 1]} : vector<8x256xf32> to vector<8x128xf32>
    %193 = vector.extract_strided_slice %191 {offsets = [0, 128], sizes = [8, 128], strides = [1, 1]} : vector<8x256xf32> to vector<8x128xf32>
    %194 = vector.extract_strided_slice %192 {offsets = [0, 0], sizes = [8, 96], strides = [1, 1]} : vector<8x128xf32> to vector<8x96xf32>
    %195 = arith.negf %194 : vector<8x96xf32>
    %196 = math.exp %195 : vector<8x96xf32>
    %cst_25 = arith.constant 1.000000e+00 : f32
    %197 = vector.broadcast %cst_25 : f32 to vector<8x96xf32>
    %198 = arith.addf %197, %196 : vector<8x96xf32>
    %199 = arith.divf %197, %198 : vector<8x96xf32>
    %200 = vector.extract_strided_slice %192 {offsets = [0, 96], sizes = [8, 32], strides = [1, 1]} : vector<8x128xf32> to vector<8x32xf32>
    %201 = math.tanh %200 : vector<8x32xf32>
    %202 = vector.extract_strided_slice %199 {offsets = [0, 0], sizes = [8, 32], strides = [1, 1]} : vector<8x96xf32> to vector<8x32xf32>
    %203 = vector.extract_strided_slice %199 {offsets = [0, 32], sizes = [8, 32], strides = [1, 1]} : vector<8x96xf32> to vector<8x32xf32>
    %204 = vector.extract_strided_slice %199 {offsets = [0, 64], sizes = [8, 32], strides = [1, 1]} : vector<8x96xf32> to vector<8x32xf32>
    %205 = arith.mulf %203, %168 : vector<8x32xf32>
    %206 = arith.mulf %202, %201 : vector<8x32xf32>
    %207 = arith.addf %205, %206 : vector<8x32xf32>
    %208 = math.tanh %207 : vector<8x32xf32>
    %209 = arith.mulf %204, %208 : vector<8x32xf32>
    %210 = vector.extract_strided_slice %6 {offsets = [40, 0], sizes = [8, 128], strides = [1, 1]} : vector<64x128xf32> to vector<8x128xf32>
    %211 = arith.addf %210, %193 : vector<8x128xf32>
    %212 = vector.extract_strided_slice %211 {offsets = [0, 0], sizes = [8, 96], strides = [1, 1]} : vector<8x128xf32> to vector<8x96xf32>
    %213 = arith.negf %212 : vector<8x96xf32>
    %214 = math.exp %213 : vector<8x96xf32>
    %cst_26 = arith.constant 1.000000e+00 : f32
    %215 = vector.broadcast %cst_26 : f32 to vector<8x96xf32>
    %216 = arith.addf %215, %214 : vector<8x96xf32>
    %217 = arith.divf %215, %216 : vector<8x96xf32>
    %218 = vector.extract_strided_slice %211 {offsets = [0, 96], sizes = [8, 32], strides = [1, 1]} : vector<8x128xf32> to vector<8x32xf32>
    %219 = math.tanh %218 : vector<8x32xf32>
    %220 = vector.extract_strided_slice %217 {offsets = [0, 0], sizes = [8, 32], strides = [1, 1]} : vector<8x96xf32> to vector<8x32xf32>
    %221 = vector.extract_strided_slice %217 {offsets = [0, 32], sizes = [8, 32], strides = [1, 1]} : vector<8x96xf32> to vector<8x32xf32>
    %222 = vector.extract_strided_slice %217 {offsets = [0, 64], sizes = [8, 32], strides = [1, 1]} : vector<8x96xf32> to vector<8x32xf32>
    %223 = arith.mulf %221, %186 : vector<8x32xf32>
    %224 = arith.mulf %220, %219 : vector<8x32xf32>
    %225 = arith.addf %223, %224 : vector<8x32xf32>
    %226 = math.tanh %225 : vector<8x32xf32>
    %227 = arith.mulf %222, %226 : vector<8x32xf32>
    %228 = tpu.concatenate %227, %209 in 1 : vector<8x32xf32>, vector<8x32xf32> -> vector<8x64xf32>
    %cst_27 = arith.constant dense<0.000000e+00> : vector<8x256xf32>
    %229 = tpu.matmul %228, %7, %cst_27 {dimension_numbers = #tpu.dot_dimension_numbers<[1], [0], [0], [1], [0, 0, 1, 1], [], []>} : vector<8x64xf32>, vector<64x256xf32>, vector<8x256xf32> -> vector<8x256xf32>
    %230 = arith.addf %229, %10 : vector<8x256xf32>
    %231 = vector.extract_strided_slice %230 {offsets = [0, 0], sizes = [8, 128], strides = [1, 1]} : vector<8x256xf32> to vector<8x128xf32>
    %232 = vector.extract_strided_slice %230 {offsets = [0, 128], sizes = [8, 128], strides = [1, 1]} : vector<8x256xf32> to vector<8x128xf32>
    %233 = vector.extract_strided_slice %231 {offsets = [0, 0], sizes = [8, 96], strides = [1, 1]} : vector<8x128xf32> to vector<8x96xf32>
    %234 = arith.negf %233 : vector<8x96xf32>
    %235 = math.exp %234 : vector<8x96xf32>
    %cst_28 = arith.constant 1.000000e+00 : f32
    %236 = vector.broadcast %cst_28 : f32 to vector<8x96xf32>
    %237 = arith.addf %236, %235 : vector<8x96xf32>
    %238 = arith.divf %236, %237 : vector<8x96xf32>
    %239 = vector.extract_strided_slice %231 {offsets = [0, 96], sizes = [8, 32], strides = [1, 1]} : vector<8x128xf32> to vector<8x32xf32>
    %240 = math.tanh %239 : vector<8x32xf32>
    %241 = vector.extract_strided_slice %238 {offsets = [0, 0], sizes = [8, 32], strides = [1, 1]} : vector<8x96xf32> to vector<8x32xf32>
    %242 = vector.extract_strided_slice %238 {offsets = [0, 32], sizes = [8, 32], strides = [1, 1]} : vector<8x96xf32> to vector<8x32xf32>
    %243 = vector.extract_strided_slice %238 {offsets = [0, 64], sizes = [8, 32], strides = [1, 1]} : vector<8x96xf32> to vector<8x32xf32>
    %244 = arith.mulf %242, %207 : vector<8x32xf32>
    %245 = arith.mulf %241, %240 : vector<8x32xf32>
    %246 = arith.addf %244, %245 : vector<8x32xf32>
    %247 = math.tanh %246 : vector<8x32xf32>
    %248 = arith.mulf %243, %247 : vector<8x32xf32>
    %249 = vector.extract_strided_slice %6 {offsets = [48, 0], sizes = [8, 128], strides = [1, 1]} : vector<64x128xf32> to vector<8x128xf32>
    %250 = arith.addf %249, %232 : vector<8x128xf32>
    %251 = vector.extract_strided_slice %250 {offsets = [0, 0], sizes = [8, 96], strides = [1, 1]} : vector<8x128xf32> to vector<8x96xf32>
    %252 = arith.negf %251 : vector<8x96xf32>
    %253 = math.exp %252 : vector<8x96xf32>
    %cst_29 = arith.constant 1.000000e+00 : f32
    %254 = vector.broadcast %cst_29 : f32 to vector<8x96xf32>
    %255 = arith.addf %254, %253 : vector<8x96xf32>
    %256 = arith.divf %254, %255 : vector<8x96xf32>
    %257 = vector.extract_strided_slice %250 {offsets = [0, 96], sizes = [8, 32], strides = [1, 1]} : vector<8x128xf32> to vector<8x32xf32>
    %258 = math.tanh %257 : vector<8x32xf32>
    %259 = vector.extract_strided_slice %256 {offsets = [0, 0], sizes = [8, 32], strides = [1, 1]} : vector<8x96xf32> to vector<8x32xf32>
    %260 = vector.extract_strided_slice %256 {offsets = [0, 32], sizes = [8, 32], strides = [1, 1]} : vector<8x96xf32> to vector<8x32xf32>
    %261 = vector.extract_strided_slice %256 {offsets = [0, 64], sizes = [8, 32], strides = [1, 1]} : vector<8x96xf32> to vector<8x32xf32>
    %262 = arith.mulf %260, %225 : vector<8x32xf32>
    %263 = arith.mulf %259, %258 : vector<8x32xf32>
    %264 = arith.addf %262, %263 : vector<8x32xf32>
    %265 = math.tanh %264 : vector<8x32xf32>
    %266 = arith.mulf %261, %265 : vector<8x32xf32>
    %267 = tpu.concatenate %266, %248 in 1 : vector<8x32xf32>, vector<8x32xf32> -> vector<8x64xf32>
    %cst_30 = arith.constant dense<0.000000e+00> : vector<8x256xf32>
    %268 = tpu.matmul %267, %7, %cst_30 {dimension_numbers = #tpu.dot_dimension_numbers<[1], [0], [0], [1], [0, 0, 1, 1], [], []>} : vector<8x64xf32>, vector<64x256xf32>, vector<8x256xf32> -> vector<8x256xf32>
    %269 = arith.addf %268, %10 : vector<8x256xf32>
    %270 = vector.extract_strided_slice %269 {offsets = [0, 0], sizes = [8, 128], strides = [1, 1]} : vector<8x256xf32> to vector<8x128xf32>
    %271 = vector.extract_strided_slice %269 {offsets = [0, 128], sizes = [8, 128], strides = [1, 1]} : vector<8x256xf32> to vector<8x128xf32>
    %272 = vector.extract_strided_slice %270 {offsets = [0, 0], sizes = [8, 96], strides = [1, 1]} : vector<8x128xf32> to vector<8x96xf32>
    %273 = arith.negf %272 : vector<8x96xf32>
    %274 = math.exp %273 : vector<8x96xf32>
    %cst_31 = arith.constant 1.000000e+00 : f32
    %275 = vector.broadcast %cst_31 : f32 to vector<8x96xf32>
    %276 = arith.addf %275, %274 : vector<8x96xf32>
    %277 = arith.divf %275, %276 : vector<8x96xf32>
    %278 = vector.extract_strided_slice %270 {offsets = [0, 96], sizes = [8, 32], strides = [1, 1]} : vector<8x128xf32> to vector<8x32xf32>
    %279 = math.tanh %278 : vector<8x32xf32>
    %280 = vector.extract_strided_slice %277 {offsets = [0, 0], sizes = [8, 32], strides = [1, 1]} : vector<8x96xf32> to vector<8x32xf32>
    %281 = vector.extract_strided_slice %277 {offsets = [0, 32], sizes = [8, 32], strides = [1, 1]} : vector<8x96xf32> to vector<8x32xf32>
    %282 = vector.extract_strided_slice %277 {offsets = [0, 64], sizes = [8, 32], strides = [1, 1]} : vector<8x96xf32> to vector<8x32xf32>
    %283 = arith.mulf %281, %246 : vector<8x32xf32>
    %284 = arith.mulf %280, %279 : vector<8x32xf32>
    %285 = arith.addf %283, %284 : vector<8x32xf32>
    %286 = math.tanh %285 : vector<8x32xf32>
    %287 = arith.mulf %282, %286 : vector<8x32xf32>
    %288 = vector.extract_strided_slice %6 {offsets = [56, 0], sizes = [8, 128], strides = [1, 1]} : vector<64x128xf32> to vector<8x128xf32>
    %289 = arith.addf %288, %271 : vector<8x128xf32>
    %290 = vector.extract_strided_slice %289 {offsets = [0, 0], sizes = [8, 96], strides = [1, 1]} : vector<8x128xf32> to vector<8x96xf32>
    %291 = arith.negf %290 : vector<8x96xf32>
    %292 = math.exp %291 : vector<8x96xf32>
    %cst_32 = arith.constant 1.000000e+00 : f32
    %293 = vector.broadcast %cst_32 : f32 to vector<8x96xf32>
    %294 = arith.addf %293, %292 : vector<8x96xf32>
    %295 = arith.divf %293, %294 : vector<8x96xf32>
    %296 = vector.extract_strided_slice %289 {offsets = [0, 96], sizes = [8, 32], strides = [1, 1]} : vector<8x128xf32> to vector<8x32xf32>
    %297 = math.tanh %296 : vector<8x32xf32>
    %298 = vector.extract_strided_slice %295 {offsets = [0, 0], sizes = [8, 32], strides = [1, 1]} : vector<8x96xf32> to vector<8x32xf32>
    %299 = vector.extract_strided_slice %295 {offsets = [0, 32], sizes = [8, 32], strides = [1, 1]} : vector<8x96xf32> to vector<8x32xf32>
    %300 = vector.extract_strided_slice %295 {offsets = [0, 64], sizes = [8, 32], strides = [1, 1]} : vector<8x96xf32> to vector<8x32xf32>
    %301 = arith.mulf %299, %264 : vector<8x32xf32>
    %302 = arith.mulf %298, %297 : vector<8x32xf32>
    %303 = arith.addf %301, %302 : vector<8x32xf32>
    %304 = math.tanh %303 : vector<8x32xf32>
    %305 = arith.mulf %300, %304 : vector<8x32xf32>
    %306 = tpu.concatenate %305, %287 in 1 : vector<8x32xf32>, vector<8x32xf32> -> vector<8x64xf32>
    %cst_33 = arith.constant dense<0.000000e+00> : vector<8x256xf32>
    %307 = tpu.matmul %306, %7, %cst_33 {dimension_numbers = #tpu.dot_dimension_numbers<[1], [0], [0], [1], [0, 0, 1, 1], [], []>} : vector<8x64xf32>, vector<64x256xf32>, vector<8x256xf32> -> vector<8x256xf32>
    %308 = arith.addf %307, %10 : vector<8x256xf32>
    %309 = vector.extract_strided_slice %308 {offsets = [0, 0], sizes = [8, 128], strides = [1, 1]} : vector<8x256xf32> to vector<8x128xf32>
    %310 = vector.extract_strided_slice %309 {offsets = [0, 0], sizes = [8, 96], strides = [1, 1]} : vector<8x128xf32> to vector<8x96xf32>
    %311 = arith.negf %310 : vector<8x96xf32>
    %312 = math.exp %311 : vector<8x96xf32>
    %cst_34 = arith.constant 1.000000e+00 : f32
    %313 = vector.broadcast %cst_34 : f32 to vector<8x96xf32>
    %314 = arith.addf %313, %312 : vector<8x96xf32>
    %315 = arith.divf %313, %314 : vector<8x96xf32>
    %316 = vector.extract_strided_slice %309 {offsets = [0, 96], sizes = [8, 32], strides = [1, 1]} : vector<8x128xf32> to vector<8x32xf32>
    %317 = math.tanh %316 : vector<8x32xf32>
    %318 = vector.extract_strided_slice %315 {offsets = [0, 0], sizes = [8, 32], strides = [1, 1]} : vector<8x96xf32> to vector<8x32xf32>
    %319 = vector.extract_strided_slice %315 {offsets = [0, 32], sizes = [8, 32], strides = [1, 1]} : vector<8x96xf32> to vector<8x32xf32>
    %320 = vector.extract_strided_slice %315 {offsets = [0, 64], sizes = [8, 32], strides = [1, 1]} : vector<8x96xf32> to vector<8x32xf32>
    %321 = arith.mulf %319, %285 : vector<8x32xf32>
    %322 = arith.mulf %318, %317 : vector<8x32xf32>
    %323 = arith.addf %321, %322 : vector<8x32xf32>
    %324 = math.tanh %323 : vector<8x32xf32>
    %325 = arith.mulf %320, %324 : vector<8x32xf32>
    %326 = tpu.concatenate %305, %303, %325, %323 in 1 : vector<8x32xf32>, vector<8x32xf32>, vector<8x32xf32>, vector<8x32xf32> -> vector<8x128xf32>
    %327 = math.tanh %326 : vector<8x128xf32>
    %c32 = arith.constant 32 : index
    %c0_35 = arith.constant 0 : index
    %328 = vector.load %arg2[%c32, %c0_35] : memref<162x128xf32, #tpu.memory_space<vmem>>, vector<128x128xf32>
    %c161 = arith.constant 161 : index
    %c0_36 = arith.constant 0 : index
    %329 = vector.load %arg2[%c161, %c0_36] : memref<162x128xf32, #tpu.memory_space<vmem>>, vector<1x128xf32>
    %cst_37 = arith.constant dense<0.000000e+00> : vector<8x128xf32>
    %330 = tpu.matmul %327, %328, %cst_37 {dimension_numbers = #tpu.dot_dimension_numbers<[1], [0], [0], [1], [0, 0, 1, 1], [], []>} : vector<8x128xf32>, vector<128x128xf32>, vector<8x128xf32> -> vector<8x128xf32>
    %331 = vector.broadcast %329 : vector<1x128xf32> to vector<8x128xf32>
    %332 = arith.addf %330, %331 : vector<8x128xf32>
    %c0_38 = arith.constant 0 : index
    %c0_39 = arith.constant 0 : index
    %333 = vector.load %arg4[%c0_38, %c0_39] : memref<8x128xf32, #tpu.memory_space<vmem>>, vector<8x128xf32>
    tpu.vector_store %arg4[%c0_38, %c0_39], %332 {strides = array<i32>} : memref<8x128xf32, #tpu.memory_space<vmem>>, vector<8x128xf32>,
    return
  }
  func.func @transform_0(%arg0: i32) -> (i32, i32) {
    %c0_i32 = arith.constant 0 : i32
    %c0_i32_0 = arith.constant 0 : i32
    return %arg0, %c0_i32 : i32, i32
  }
  func.func @transform_1(%arg0: i32) -> (i32, i32) {
    %c0_i32 = arith.constant 0 : i32
    %c0_i32_0 = arith.constant 0 : i32
    %c0_i32_1 = arith.constant 0 : i32
    return %c0_i32, %c0_i32_0 : i32, i32
  }
  func.func @transform_2(%arg0: i32) -> (i32, i32) {
    %c0_i32 = arith.constant 0 : i32
    %c0_i32_0 = arith.constant 0 : i32
    %c0_i32_1 = arith.constant 0 : i32
    return %c0_i32, %c0_i32_0 : i32, i32
  }
  func.func @transform_3(%arg0: i32) -> (i32, i32) {
    %c0_i32 = arith.constant 0 : i32
    %c0_i32_0 = arith.constant 0 : i32
    return %arg0, %c0_i32 : i32, i32
  }
}

</mosaic_0001>

<llo_original>
// kernel: tpu_custom_call.1
$region0: #{tpu_custom_call.1}
  #allocation0 [shape = 'u32[]', space=smem, size = 0x4, offset = 0x4, fixed_abs, tag = 'smem constant byte address 0x4 - core index']
  #allocation1 [shape = 'u32[144,128]{1,0:T(1,128)}', space=vmem, size = 0x12000, scoped, tag = 'internal scratch']
  %s0 = inlined_call_operand.vmem [shape: f32[64,32], index: 0, kind: input, shape index: {}]
  %s1 = inlined_call_operand.hbm [shape: f32[162,128], index: 1, kind: input, shape index: {}]
  %s2 = inlined_call_operand.hbm [shape: f32[65,256], index: 2, kind: input, shape index: {}]
  %s3 = inlined_call_operand.hbm [shape: f32[8,128], index: 3, kind: output, shape index: {}]
  %s4 = sld [smem:[#allocation0]]
  $region30: #{tpu_custom_call.1} parent=0
    _
  %s6 = ssub.s32 1, %s4
  %s7 = scalar_select 0, %s6, %s4
  $region1: #{tpu_custom_call.1} parent=0
    #allocation2 [shape = 'u8[86016]{0}', space=vmem, size = 0x15000, scoped, tag = 'input window, operand 1, single buffered']
    #allocation3 [shape = 's32[1]{0}', space=sflag, size = 0x4, scoped, tag = 'scoped memory for tpu_custom_call.1']
    #allocation4 [shape = 's32[1]{0}', space=sflag, size = 0x4, scoped, tag = 'scoped memory for tpu_custom_call.1']
    #allocation5 [shape = 'u8[73728]{0}', space=vmem, size = 0x12000, scoped, tag = 'input window, operand 2, single buffered']
    #allocation6 [shape = 's32[1]{0}', space=sflag, size = 0x4, scoped, tag = 'scoped memory for tpu_custom_call.1']
    #allocation7 [shape = 'u8[4096]{0}', space=vmem, size = 0x1000, scoped, tag = 'output window, operand 0, single buffered']
    %8 = vsyncpa [#allocation3], 0
    %9 = vsyncpa [#allocation6], 0
    %10 = vsyncpa [#allocation4], 0
    // Predicated region
    $region2: #{tpu_custom_call.1} parent=1 // pred_check
      _
    $region3: #{tpu_custom_call.1} parent=1 // pred_check_branch
      %12 = sbr.rel (0) target = $region5
    $region4: #{tpu_custom_call.1} parent=1 // pred_region
      _
    $region5: #{tpu_custom_call.1} parent=1 // pred_fallthru
      _
    // Predicated region
    $region6: #{tpu_custom_call.1} parent=1 // pred_check
      _
    $region7: #{tpu_custom_call.1} parent=1 // pred_check_branch
      %14 = sbr.rel (0) target = $region9
    $region8: #{tpu_custom_call.1} parent=1 // pred_region
      %s16 = ssub.s32 2688, 2688
      %17 = vsyncadd [#allocation3], %s16
      %s18 = sshll.u32 [#allocation2], 4
      %s19 = int_to_ptr.vmem [resolvable:$true] %s18
      %24 = dma.hbm_to_vmem [thread:$0]  %s1, 2688, %s19, [#allocation3], 128, 128, 8
    $region9: #{tpu_custom_call.1} parent=1 // pred_fallthru
      _
    // Predicated region
    $region10: #{tpu_custom_call.1} parent=1 // pred_check
      _
    $region11: #{tpu_custom_call.1} parent=1 // pred_check_branch
      %26 = sbr.rel (0) target = $region13
    $region12: #{tpu_custom_call.1} parent=1 // pred_region
      %s28 = ssub.s32 2304, 2304
      %29 = vsyncadd [#allocation6], %s28
      %s30 = sshll.u32 [#allocation5], 4
      %s31 = int_to_ptr.vmem [resolvable:$true] %s30
      %36 = dma.hbm_to_vmem [thread:$0]  %s2, 2304, %s31, [#allocation6], 256, 256, 16
    $region13: #{tpu_custom_call.1} parent=1 // pred_fallthru
      _
    // Predicated region
    $region14: #{tpu_custom_call.1} parent=1 // pred_check
      _
    $region15: #{tpu_custom_call.1} parent=1 // pred_check_branch
      %38 = sbr.rel (0) target = $region17
    $region16: #{tpu_custom_call.1} parent=1 // pred_region
      %39 = dma.done [#allocation3], 2688
    $region17: #{tpu_custom_call.1} parent=1 // pred_fallthru
      _
    // Predicated region
    $region18: #{tpu_custom_call.1} parent=1 // pred_check
      _
    $region19: #{tpu_custom_call.1} parent=1 // pred_check_branch
      %41 = sbr.rel (0) target = $region21
    $region20: #{tpu_custom_call.1} parent=1 // pred_region
      %42 = dma.done [#allocation6], 2304
    $region21: #{tpu_custom_call.1} parent=1 // pred_fallthru
      _
    %v43 = vld [vmem:[#allocation2] sm:$0xff]
    %v44 = vld [vmem:[#allocation2 + $0x8] sm:$0xff]
    %v45 = vld [vmem:[#allocation2 + $0x10] sm:$0xff]
    %v46 = vld [vmem:[#allocation2 + $0x18] sm:$0xff]
    %v47 = vld [vmem:[#allocation2 + $0xa0] sm:$0x1]
    %v48 = vld [vmem:[%s0] sm:$0xff]
    %v49 = vld [vmem:[%s0 + $0x8] sm:$0xff]
    %v50 = vld [vmem:[%s0 + $0x10] sm:$0xff]
    %v51 = vld [vmem:[%s0 + $0x18] sm:$0xff]
    %v52 = vld [vmem:[%s0 + $0x20] sm:$0xff]
    %v53 = vld [vmem:[%s0 + $0x28] sm:$0xff]
    %v54 = vld [vmem:[%s0 + $0x30] sm:$0xff]
    %v55 = vld [vmem:[%s0 + $0x38] sm:$0xff]
    %v56 = vtanh.pop %v48
    %v57 = vtanh.pop %v49
    %v58 = vtanh.pop %v50
    %v59 = vtanh.pop %v51
    %v60 = vtanh.pop %v52
    %v61 = vtanh.pop %v53
    %v62 = vtanh.pop %v54
    %v63 = vtanh.pop %v55
    %v64 = vlaneseq
    %v65 = vshrl.u32 %v64, 7
    %v66 = vsub.s32 0, %v65
    %v67 = vrot.slane %v47, %v66
    %vm68 = vcmask 261120
    %v70 = vsel %vm68, %v56, 0
    %v73 = vsel %vm68, %v57, 0
    %v76 = vsel %vm68, %v58, 0
    %v79 = vsel %vm68, %v59, 0
    %v82 = vsel %vm68, %v60, 0
    %v85 = vsel %vm68, %v61, 0
    %v88 = vsel %vm68, %v62, 0
    %v91 = vsel %vm68, %v63, 0
    %93 = vmatprep.subr.mxu0 0.0
    %94 = vmatpush1.msra.mxu0 %v43
    %95 = vmatprep.subr.mxu0 0.0
    %96 = vmatpush1.msra.mxu0 %v44
    %97 = vmatprep.subr.mxu0 0.0
    %98 = vmatpush1.msra.mxu0 %v45
    %99 = vmatprep.subr.mxu0 0.0
    %100 = vmatpush1.msra.mxu0 %v46
    %101 = vmatprep.subr.mxu0 0.0
    %102 = vmatpush1.msra.mxu0 0.0
    %103 = vmatprep.subr.mxu0 0.0
    %104 = vmatpush1.msra.mxu0 0.0
    %105 = vmatprep.subr.mxu0 0.0
    %106 = vmatpush1.msra.mxu0 0.0
    %107 = vmatprep.subr.mxu0 0.0
    %108 = vmatpush1.msra.mxu0 0.0
    %109 = vmatprep.subr.mxu0 0.0
    %110 = vmatpush1.msra.mxu0 0.0
    %111 = vmatprep.subr.mxu0 0.0
    %112 = vmatpush1.msra.mxu0 0.0
    %113 = vmatprep.subr.mxu0 0.0
    %114 = vmatpush1.msra.mxu0 0.0
    %115 = vmatprep.subr.mxu0 0.0
    %116 = vmatpush1.msra.mxu0 0.0
    %117 = vmatprep.subr.mxu0 0.0
    %118 = vmatpush1.msra.mxu0 0.0
    %119 = vmatprep.subr.mxu0 0.0
    %120 = vmatpush1.msra.mxu0 0.0
    %121 = vmatprep.subr.mxu0 0.0
    %122 = vmatpush1.msra.mxu0 0.0
    %123 = vmatprep.subr.mxu0 0.0
    %124 = vmatpush1.msra.mxu0 0.0
    %125 = vmatprep.subr.mxu0 0.0
    %126 = vmatpush1.msra.mxu0 0.0
    %127 = vmatprep.subr.mxu0 0.0
    %128 = vmatpush1.msra.mxu0 0.0
    %129 = vmatprep.subr.mxu0 0.0
    %130 = vmatpush1.msra.mxu0 0.0
    %131 = vmatprep.subr.mxu0 0.0
    %132 = vmatpush1.msra.mxu0 0.0
    %133 = vmatprep.subr.mxu0 0.0
    %134 = vmatpush1.msra.mxu0 0.0
    %135 = vmatprep.subr.mxu0 0.0
    %136 = vmatpush1.msra.mxu0 0.0
    %137 = vmatprep.subr.mxu0 0.0
    %138 = vmatpush1.msra.mxu0 0.0
    %139 = vmatprep.subr.mxu0 0.0
    %140 = vmatpush1.msra.mxu0 0.0
    %141 = vmatprep.subr.mxu0 0.0
    %142 = vmatpush1.msra.mxu0 0.0
    %143 = vmatprep.subr.mxu0 0.0
    %144 = vmatpush1.msra.mxu0 0.0
    %145 = vmatprep.subr.mxu0 0.0
    %146 = vmatpush1.msra.mxu0 0.0
    %147 = vmatprep.subr.mxu0 0.0
    %148 = vmatpush1.msra.mxu0 0.0
    %149 = vmatprep.subr.mxu0 0.0
    %150 = vmatpush1.msra.mxu0 0.0
    %151 = vmatprep.subr.mxu0 0.0
    %152 = vmatpush1.msra.mxu0 0.0
    %153 = vmatprep.subr.mxu0 0.0
    %154 = vmatpush1.msra.mxu0 0.0
    %155 = vmatprep.subr.mxu0 0.0
    %156 = vmatpush1.msra.mxu0 0.0
    %157 = vmatprep.mubr.f32.mxu0 0.0
    %158 = vmatmul.mubr.f32.gmra.mrb[0].mxu0 %v70
    %v159 = vpop.f32.mrb[0].mxu0
    %v160 = vadd.f32 %v67, %v159
    %v161 = vpop.f32.mrb[0].mxu0
    %162 = vmatprep.mubr.f32.mxu0 0.0
    %163 = vmatmul.mubr.f32.gmra.mrb[0].mxu0 %v73
    %v164 = vpop.f32.mrb[0].mxu0
    %v165 = vadd.f32 %v67, %v164
    %v166 = vpop.f32.mrb[0].mxu0
    %167 = vmatprep.mubr.f32.mxu0 0.0
    %168 = vmatmul.mubr.f32.gmra.mrb[0].mxu0 %v76
    %v169 = vpop.f32.mrb[0].mxu0
    %v170 = vadd.f32 %v67, %v169
    %v171 = vpop.f32.mrb[0].mxu0
    %172 = vmatprep.mubr.f32.mxu0 0.0
    %173 = vmatmul.mubr.f32.gmra.mrb[0].mxu0 %v79
    %v174 = vpop.f32.mrb[0].mxu0
    %v175 = vadd.f32 %v67, %v174
    %v176 = vpop.f32.mrb[0].mxu0
    %177 = vmatprep.mubr.f32.mxu0 0.0
    %178 = vmatmul.mubr.f32.gmra.mrb[0].mxu0 %v82
    %v179 = vpop.f32.mrb[0].mxu0
    %v180 = vadd.f32 %v67, %v179
    %v181 = vpop.f32.mrb[0].mxu0
    %182 = vmatprep.mubr.f32.mxu0 0.0
    %183 = vmatmul.mubr.f32.gmra.mrb[0].mxu0 %v85
    %v184 = vpop.f32.mrb[0].mxu0
    %v185 = vadd.f32 %v67, %v184
    %v186 = vpop.f32.mrb[0].mxu0
    %187 = vmatprep.mubr.f32.mxu0 0.0
    %188 = vmatmul.mubr.f32.gmra.mrb[0].mxu0 %v88
    %v189 = vpop.f32.mrb[0].mxu0
    %v190 = vadd.f32 %v67, %v189
    %v191 = vpop.f32.mrb[0].mxu0
    %192 = vmatprep.mubr.f32.mxu0 0.0
    %193 = vmatmul.mubr.f32.gmra.mrb[0].mxu0 %v91
    %v194 = vpop.f32.mrb[0].mxu0
    %v195 = vadd.f32 %v67, %v194
    %v196 = vpop.f32.mrb[0].mxu0
    %197 = vdwg.mxu0
    %v198 = vld [vmem:[#allocation5] sm:$0xff]
    %v199 = vld [vmem:[#allocation5 + $0x8] sm:$0xff]
    %v200 = vld [vmem:[#allocation5 + $0x10] sm:$0xff]
    %v201 = vld [vmem:[#allocation5 + $0x18] sm:$0xff]
    %v202 = vld [vmem:[#allocation5 + $0x20] sm:$0xff]
    %v203 = vld [vmem:[#allocation5 + $0x28] sm:$0xff]
    %v204 = vld [vmem:[#allocation5 + $0x30] sm:$0xff]
    %v205 = vld [vmem:[#allocation5 + $0x38] sm:$0xff]
    %v206 = vld [vmem:[#allocation5 + $0x40] sm:$0xff]
    %v207 = vld [vmem:[#allocation5 + $0x48] sm:$0xff]
    %v208 = vld [vmem:[#allocation5 + $0x50] sm:$0xff]
    %v209 = vld [vmem:[#allocation5 + $0x58] sm:$0xff]
    %v210 = vld [vmem:[#allocation5 + $0x60] sm:$0xff]
    %v211 = vld [vmem:[#allocation5 + $0x68] sm:$0xff]
    %v212 = vld [vmem:[#allocation5 + $0x70] sm:$0xff]
    %v213 = vld [vmem:[#allocation5 + $0x78] sm:$0xff]
    %s214 = scalar_lea.vmem [#allocation5], 128
    %v215 = vld [vmem:[%s214] ss:$8 sm:$0x3]
    %v217 = vlaneseq
    %v218 = vshrl.u32 %v217, 7
    %v219 = vsub.s32 0, %v218
    %v220 = vrot.slane %v215, %v219
    %v221 = vlaneseq
    %v222 = vshrl.u32 %v221, 7
    %v223 = vsub.s32 1, %v222
    %v224 = vrot.slane %v215, %v223
    %v227 = vadd.f32 %v160, 0.0
    %v228 = vxor.u32 %v227, 2147483648
    %v229 = vmul.f32 %v228, 1.442695
    %v230 = vpow.pop %v229
    %v231 = vadd.f32 %v230, 1.0
    %v232 = vrcp.pop %v231
    %v233 = vmul.f32 1.0, %v232
    %v234 = vtanh.pop %v227
    %v235 = vmul.f32 %v233, 0.0
    %237 = vrot.lane.b32.xlu0 %v234, 32
    %v238 = vpop.permute.xlu0 %237
    %v240 = vmul.f32 %v233, %v238
    %242 = vrot.lane.b32.xlu0 %v240, 32
    %v243 = vpop.permute.xlu0 %242
    %v245 = vadd.f32 %v235, %v243
    %v246 = vtanh.pop %v245
    %248 = vrot.lane.b32.xlu0 %v246, 32
    %v249 = vpop.permute.xlu0 %248
    %v251 = vmul.f32 %v233, %v249
    %253 = vrot.lane.b32.xlu0 %v251, 64
    %v254 = vpop.permute.xlu0 %253
    %v256 = vsel %vm68, %v254, 0.0
    %vm257 = vcmask 523264
    %v259 = vsel %vm257, %v256, 0
    %261 = vmatprep.subr.mxu0 %v199
    %262 = vmatpush1.msra.mxu0 %v198
    %263 = vmatprep.subr.mxu0 %v201
    %264 = vmatpush1.msra.mxu0 %v200
    %265 = vmatprep.subr.mxu0 %v203
    %266 = vmatpush1.msra.mxu0 %v202
    %267 = vmatprep.subr.mxu0 %v205
    %268 = vmatpush1.msra.mxu0 %v204
    %269 = vmatprep.subr.mxu0 %v207
    %270 = vmatpush1.msra.mxu0 %v206
    %271 = vmatprep.subr.mxu0 %v209
    %272 = vmatpush1.msra.mxu0 %v208
    %273 = vmatprep.subr.mxu0 %v211
    %274 = vmatpush1.msra.mxu0 %v210
    %275 = vmatprep.subr.mxu0 %v213
    %276 = vmatpush1.msra.mxu0 %v212
    %277 = vmatprep.subr.mxu0 0.0
    %278 = vmatpush1.msra.mxu0 0.0
    %279 = vmatprep.subr.mxu0 0.0
    %280 = vmatpush1.msra.mxu0 0.0
    %281 = vmatprep.subr.mxu0 0.0
    %282 = vmatpush1.msra.mxu0 0.0
    %283 = vmatprep.subr.mxu0 0.0
    %284 = vmatpush1.msra.mxu0 0.0
    %285 = vmatprep.subr.mxu0 0.0
    %286 = vmatpush1.msra.mxu0 0.0
    %287 = vmatprep.subr.mxu0 0.0
    %288 = vmatpush1.msra.mxu0 0.0
    %289 = vmatprep.subr.mxu0 0.0
    %290 = vmatpush1.msra.mxu0 0.0
    %291 = vmatprep.subr.mxu0 0.0
    %292 = vmatpush1.msra.mxu0 0.0
    %293 = vmatprep.subr.mxu0 0.0
    %294 = vmatpush1.msra.mxu0 0.0
    %295 = vmatprep.subr.mxu0 0.0
    %296 = vmatpush1.msra.mxu0 0.0
    %297 = vmatprep.subr.mxu0 0.0
    %298 = vmatpush1.msra.mxu0 0.0
    %299 = vmatprep.subr.mxu0 0.0
    %300 = vmatpush1.msra.mxu0 0.0
    %301 = vmatprep.subr.mxu0 0.0
    %302 = vmatpush1.msra.mxu0 0.0
    %303 = vmatprep.subr.mxu0 0.0
    %304 = vmatpush1.msra.mxu0 0.0
    %305 = vmatprep.subr.mxu0 0.0
    %306 = vmatpush1.msra.mxu0 0.0
    %307 = vmatprep.subr.mxu0 0.0
    %308 = vmatpush1.msra.mxu0 0.0
    %309 = vmatprep.subr.mxu0 0.0
    %310 = vmatpush1.msra.mxu0 0.0
    %311 = vmatprep.subr.mxu0 0.0
    %312 = vmatpush1.msra.mxu0 0.0
    %313 = vmatprep.subr.mxu0 0.0
    %314 = vmatpush1.msra.mxu0 0.0
    %315 = vmatprep.subr.mxu0 0.0
    %316 = vmatpush1.msra.mxu0 0.0
    %317 = vmatprep.subr.mxu0 0.0
    %318 = vmatpush1.msra.mxu0 0.0
    %319 = vmatprep.subr.mxu0 0.0
    %320 = vmatpush1.msra.mxu0 0.0
    %321 = vmatprep.subr.mxu0 0.0
    %322 = vmatpush1.msra.mxu0 0.0
    %323 = vmatprep.subr.mxu0 0.0
    %324 = vmatpush1.msra.mxu0 0.0
    %325 = vmatprep.mubr.f32.mxu0 0.0
    %326 = vmatmul.mubr.f32.gmra.mrb[0].mxu0 %v259
    %v327 = vpop.f32.mrb[0].mxu0
    %v328 = vadd.f32 %v220, %v327
    %v329 = vpop.f32.mrb[0].mxu0
    %v330 = vadd.f32 %v224, %v329
    %331 = vdwg.mxu0
    %v332 = vxor.u32 %v328, 2147483648
    %v333 = vmul.f32 %v332, 1.442695
    %v334 = vpow.pop %v333
    %v335 = vadd.f32 %v334, 1.0
    %v336 = vrcp.pop %v335
    %v337 = vmul.f32 1.0, %v336
    %v338 = vtanh.pop %v328
    %v339 = vmul.f32 %v337, 0.0
    %341 = vrot.lane.b32.xlu0 %v338, 32
    %v342 = vpop.permute.xlu0 %341
    %v344 = vmul.f32 %v337, %v342
    %346 = vrot.lane.b32.xlu0 %v344, 32
    %v347 = vpop.permute.xlu0 %346
    %v349 = vadd.f32 %v339, %v347
    %v350 = vtanh.pop %v349
    %352 = vrot.lane.b32.xlu0 %v350, 32
    %v353 = vpop.permute.xlu0 %352
    %v355 = vmul.f32 %v337, %v353
    %v356 = vadd.f32 %v165, %v330
    %v357 = vxor.u32 %v356, 2147483648
    %v358 = vmul.f32 %v357, 1.442695
    %v359 = vpow.pop %v358
    %v360 = vadd.f32 %v359, 1.0
    %v361 = vrcp.pop %v360
    %v362 = vmul.f32 1.0, %v361
    %v363 = vtanh.pop %v356
    %v364 = vmul.f32 %v362, %v245
    %366 = vrot.lane.b32.xlu0 %v363, 32
    %v367 = vpop.permute.xlu0 %366
    %v369 = vmul.f32 %v362, %v367
    %371 = vrot.lane.b32.xlu0 %v369, 32
    %v372 = vpop.permute.xlu0 %371
    %v374 = vadd.f32 %v364, %v372
    %v375 = vtanh.pop %v374
    %377 = vrot.lane.b32.xlu0 %v375, 32
    %v378 = vpop.permute.xlu0 %377
    %v380 = vmul.f32 %v362, %v378
    %382 = vrot.lane.b32.xlu0 %v380, 64
    %v383 = vpop.permute.xlu0 %382
    %386 = vrot.lane.b32.xlu0 %v355, 96
    %v387 = vpop.permute.xlu0 %386
    %v389 = vsel %vm68, %v383, %v387
    %v391 = vsel %vm257, %v389, 0
    %393 = vmatprep.subr.mxu0 %v199
    %394 = vmatpush1.msra.mxu0 %v198
    %395 = vmatprep.subr.mxu0 %v201
    %396 = vmatpush1.msra.mxu0 %v200
    %397 = vmatprep.subr.mxu0 %v203
    %398 = vmatpush1.msra.mxu0 %v202
    %399 = vmatprep.subr.mxu0 %v205
    %400 = vmatpush1.msra.mxu0 %v204
    %401 = vmatprep.subr.mxu0 %v207
    %402 = vmatpush1.msra.mxu0 %v206
    %403 = vmatprep.subr.mxu0 %v209
    %404 = vmatpush1.msra.mxu0 %v208
    %405 = vmatprep.subr.mxu0 %v211
    %406 = vmatpush1.msra.mxu0 %v210
    %407 = vmatprep.subr.mxu0 %v213
    %408 = vmatpush1.msra.mxu0 %v212
    %409 = vmatprep.subr.mxu0 0.0
    %410 = vmatpush1.msra.mxu0 0.0
    %411 = vmatprep.subr.mxu0 0.0
    %412 = vmatpush1.msra.mxu0 0.0
    %413 = vmatprep.subr.mxu0 0.0
    %414 = vmatpush1.msra.mxu0 0.0
    %415 = vmatprep.subr.mxu0 0.0
    %416 = vmatpush1.msra.mxu0 0.0
    %417 = vmatprep.subr.mxu0 0.0
    %418 = vmatpush1.msra.mxu0 0.0
    %419 = vmatprep.subr.mxu0 0.0
    %420 = vmatpush1.msra.mxu0 0.0
    %421 = vmatprep.subr.mxu0 0.0
    %422 = vmatpush1.msra.mxu0 0.0
    %423 = vmatprep.subr.mxu0 0.0
    %424 = vmatpush1.msra.mxu0 0.0
    %425 = vmatprep.subr.mxu0 0.0
    %426 = vmatpush1.msra.mxu0 0.0
    %427 = vmatprep.subr.mxu0 0.0
    %428 = vmatpush1.msra.mxu0 0.0
    %429 = vmatprep.subr.mxu0 0.0
    %430 = vmatpush1.msra.mxu0 0.0
    %431 = vmatprep.subr.mxu0 0.0
    %432 = vmatpush1.msra.mxu0 0.0
    %433 = vmatprep.subr.mxu0 0.0
    %434 = vmatpush1.msra.mxu0 0.0
    %435 = vmatprep.subr.mxu0 0.0
    %436 = vmatpush1.msra.mxu0 0.0
    %437 = vmatprep.subr.mxu0 0.0
    %438 = vmatpush1.msra.mxu0 0.0
    %439 = vmatprep.subr.mxu0 0.0
    %440 = vmatpush1.msra.mxu0 0.0
    %441 = vmatprep.subr.mxu0 0.0
    %442 = vmatpush1.msra.mxu0 0.0
    %443 = vmatprep.subr.mxu0 0.0
    %444 = vmatpush1.msra.mxu0 0.0
    %445 = vmatprep.subr.mxu0 0.0
    %446 = vmatpush1.msra.mxu0 0.0
    %447 = vmatprep.subr.mxu0 0.0
    %448 = vmatpush1.msra.mxu0 0.0
    %449 = vmatprep.subr.mxu0 0.0
    %450 = vmatpush1.msra.mxu0 0.0
    %451 = vmatprep.subr.mxu0 0.0
    %452 = vmatpush1.msra.mxu0 0.0
    %453 = vmatprep.subr.mxu0 0.0
    %454 = vmatpush1.msra.mxu0 0.0
    %455 = vmatprep.subr.mxu0 0.0
    %456 = vmatpush1.msra.mxu0 0.0
    %457 = vmatprep.mubr.f32.mxu0 0.0
    %458 = vmatmul.mubr.f32.gmra.mrb[0].mxu0 %v391
    %v459 = vpop.f32.mrb[0].mxu0
    %v460 = vadd.f32 %v220, %v459
    %v461 = vpop.f32.mrb[0].mxu0
    %v462 = vadd.f32 %v224, %v461
    %463 = vdwg.mxu0
    %v464 = vxor.u32 %v460, 2147483648
    %v465 = vmul.f32 %v464, 1.442695
    %v466 = vpow.pop %v465
    %v467 = vadd.f32 %v466, 1.0
    %v468 = vrcp.pop %v467
    %v469 = vmul.f32 1.0, %v468
    %v470 = vtanh.pop %v460
    %v471 = vmul.f32 %v469, %v349
    %473 = vrot.lane.b32.xlu0 %v470, 32
    %v474 = vpop.permute.xlu0 %473
    %v476 = vmul.f32 %v469, %v474
    %478 = vrot.lane.b32.xlu0 %v476, 32
    %v479 = vpop.permute.xlu0 %478
    %v481 = vadd.f32 %v471, %v479
    %v482 = vtanh.pop %v481
    %484 = vrot.lane.b32.xlu0 %v482, 32
    %v485 = vpop.permute.xlu0 %484
    %v487 = vmul.f32 %v469, %v485
    %v488 = vadd.f32 %v170, %v462
    %v489 = vxor.u32 %v488, 2147483648
    %v490 = vmul.f32 %v489, 1.442695
    %v491 = vpow.pop %v490
    %v492 = vadd.f32 %v491, 1.0
    %v493 = vrcp.pop %v492
    %v494 = vmul.f32 1.0, %v493
    %v495 = vtanh.pop %v488
    %v496 = vmul.f32 %v494, %v374
    %498 = vrot.lane.b32.xlu0 %v495, 32
    %v499 = vpop.permute.xlu0 %498
    %v501 = vmul.f32 %v494, %v499
    %503 = vrot.lane.b32.xlu0 %v501, 32
    %v504 = vpop.permute.xlu0 %503
    %v506 = vadd.f32 %v496, %v504
    %v507 = vtanh.pop %v506
    %509 = vrot.lane.b32.xlu0 %v507, 32
    %v510 = vpop.permute.xlu0 %509
    %v512 = vmul.f32 %v494, %v510
    %514 = vrot.lane.b32.xlu0 %v512, 64
    %v515 = vpop.permute.xlu0 %514
    %518 = vrot.lane.b32.xlu0 %v487, 96
    %v519 = vpop.permute.xlu0 %518
    %v521 = vsel %vm68, %v515, %v519
    %v523 = vsel %vm257, %v521, 0
    %525 = vmatprep.subr.mxu0 %v199
    %526 = vmatpush1.msra.mxu0 %v198
    %527 = vmatprep.subr.mxu0 %v201
    %528 = vmatpush1.msra.mxu0 %v200
    %529 = vmatprep.subr.mxu0 %v203
    %530 = vmatpush1.msra.mxu0 %v202
    %531 = vmatprep.subr.mxu0 %v205
    %532 = vmatpush1.msra.mxu0 %v204
    %533 = vmatprep.subr.mxu0 %v207
    %534 = vmatpush1.msra.mxu0 %v206
    %535 = vmatprep.subr.mxu0 %v209
    %536 = vmatpush1.msra.mxu0 %v208
    %537 = vmatprep.subr.mxu0 %v211
    %538 = vmatpush1.msra.mxu0 %v210
    %539 = vmatprep.subr.mxu0 %v213
    %540 = vmatpush1.msra.mxu0 %v212
    %541 = vmatprep.subr.mxu0 0.0
    %542 = vmatpush1.msra.mxu0 0.0
    %543 = vmatprep.subr.mxu0 0.0
    %544 = vmatpush1.msra.mxu0 0.0
    %545 = vmatprep.subr.mxu0 0.0
    %546 = vmatpush1.msra.mxu0 0.0
    %547 = vmatprep.subr.mxu0 0.0
    %548 = vmatpush1.msra.mxu0 0.0
    %549 = vmatprep.subr.mxu0 0.0
    %550 = vmatpush1.msra.mxu0 0.0
    %551 = vmatprep.subr.mxu0 0.0
    %552 = vmatpush1.msra.mxu0 0.0
    %553 = vmatprep.subr.mxu0 0.0
    %554 = vmatpush1.msra.mxu0 0.0
    %555 = vmatprep.subr.mxu0 0.0
    %556 = vmatpush1.msra.mxu0 0.0
    %557 = vmatprep.subr.mxu0 0.0
    %558 = vmatpush1.msra.mxu0 0.0
    %559 = vmatprep.subr.mxu0 0.0
    %560 = vmatpush1.msra.mxu0 0.0
    %561 = vmatprep.subr.mxu0 0.0
    %562 = vmatpush1.msra.mxu0 0.0
    %563 = vmatprep.subr.mxu0 0.0
    %564 = vmatpush1.msra.mxu0 0.0
    %565 = vmatprep.subr.mxu0 0.0
    %566 = vmatpush1.msra.mxu0 0.0
    %567 = vmatprep.subr.mxu0 0.0
    %568 = vmatpush1.msra.mxu0 0.0
    %569 = vmatprep.subr.mxu0 0.0
    %570 = vmatpush1.msra.mxu0 0.0
    %571 = vmatprep.subr.mxu0 0.0
    %572 = vmatpush1.msra.mxu0 0.0
    %573 = vmatprep.subr.mxu0 0.0
    %574 = vmatpush1.msra.mxu0 0.0
    %575 = vmatprep.subr.mxu0 0.0
    %576 = vmatpush1.msra.mxu0 0.0
    %577 = vmatprep.subr.mxu0 0.0
    %578 = vmatpush1.msra.mxu0 0.0
    %579 = vmatprep.subr.mxu0 0.0
    %580 = vmatpush1.msra.mxu0 0.0
    %581 = vmatprep.subr.mxu0 0.0
    %582 = vmatpush1.msra.mxu0 0.0
    %583 = vmatprep.subr.mxu0 0.0
    %584 = vmatpush1.msra.mxu0 0.0
    %585 = vmatprep.subr.mxu0 0.0
    %586 = vmatpush1.msra.mxu0 0.0
    %587 = vmatprep.subr.mxu0 0.0
    %588 = vmatpush1.msra.mxu0 0.0
    %589 = vmatprep.mubr.f32.mxu0 0.0
    %590 = vmatmul.mubr.f32.gmra.mrb[0].mxu0 %v523
    %v591 = vpop.f32.mrb[0].mxu0
    %v592 = vadd.f32 %v220, %v591
    %v593 = vpop.f32.mrb[0].mxu0
    %v594 = vadd.f32 %v224, %v593
    %595 = vdwg.mxu0
    %v596 = vxor.u32 %v592, 2147483648
    %v597 = vmul.f32 %v596, 1.442695
    %v598 = vpow.pop %v597
    %v599 = vadd.f32 %v598, 1.0
    %v600 = vrcp.pop %v599
    %v601 = vmul.f32 1.0, %v600
    %v602 = vtanh.pop %v592
    %v603 = vmul.f32 %v601, %v481
    %605 = vrot.lane.b32.xlu0 %v602, 32
    %v606 = vpop.permute.xlu0 %605
    %v608 = vmul.f32 %v601, %v606
    %610 = vrot.lane.b32.xlu0 %v608, 32
    %v611 = vpop.permute.xlu0 %610
    %v613 = vadd.f32 %v603, %v611
    %v614 = vtanh.pop %v613
    %616 = vrot.lane.b32.xlu0 %v614, 32
    %v617 = vpop.permute.xlu0 %616
    %v619 = vmul.f32 %v601, %v617
    %v620 = vadd.f32 %v175, %v594
    %v621 = vxor.u32 %v620, 2147483648
    %v622 = vmul.f32 %v621, 1.442695
    %v623 = vpow.pop %v622
    %v624 = vadd.f32 %v623, 1.0
    %v625 = vrcp.pop %v624
    %v626 = vmul.f32 1.0, %v625
    %v627 = vtanh.pop %v620
    %v628 = vmul.f32 %v626, %v506
    %630 = vrot.lane.b32.xlu0 %v627, 32
    %v631 = vpop.permute.xlu0 %630
    %v633 = vmul.f32 %v626, %v631
    %635 = vrot.lane.b32.xlu0 %v633, 32
    %v636 = vpop.permute.xlu0 %635
    %v638 = vadd.f32 %v628, %v636
    %v639 = vtanh.pop %v638
    %641 = vrot.lane.b32.xlu0 %v639, 32
    %v642 = vpop.permute.xlu0 %641
    %v644 = vmul.f32 %v626, %v642
    %646 = vrot.lane.b32.xlu0 %v644, 64
    %v647 = vpop.permute.xlu0 %646
    %650 = vrot.lane.b32.xlu0 %v619, 96
    %v651 = vpop.permute.xlu0 %650
    %v653 = vsel %vm68, %v647, %v651
    %v655 = vsel %vm257, %v653, 0
    %657 = vmatprep.subr.mxu0 %v199
    %658 = vmatpush1.msra.mxu0 %v198
    %659 = vmatprep.subr.mxu0 %v201
    %660 = vmatpush1.msra.mxu0 %v200
    %661 = vmatprep.subr.mxu0 %v203
    %662 = vmatpush1.msra.mxu0 %v202
    %663 = vmatprep.subr.mxu0 %v205
    %664 = vmatpush1.msra.mxu0 %v204
    %665 = vmatprep.subr.mxu0 %v207
    %666 = vmatpush1.msra.mxu0 %v206
    %667 = vmatprep.subr.mxu0 %v209
    %668 = vmatpush1.msra.mxu0 %v208
    %669 = vmatprep.subr.mxu0 %v211
    %670 = vmatpush1.msra.mxu0 %v210
    %671 = vmatprep.subr.mxu0 %v213
    %672 = vmatpush1.msra.mxu0 %v212
    %673 = vmatprep.subr.mxu0 0.0
    %674 = vmatpush1.msra.mxu0 0.0
    %675 = vmatprep.subr.mxu0 0.0
    %676 = vmatpush1.msra.mxu0 0.0
    %677 = vmatprep.subr.mxu0 0.0
    %678 = vmatpush1.msra.mxu0 0.0
    %679 = vmatprep.subr.mxu0 0.0
    %680 = vmatpush1.msra.mxu0 0.0
    %681 = vmatprep.subr.mxu0 0.0
    %682 = vmatpush1.msra.mxu0 0.0
    %683 = vmatprep.subr.mxu0 0.0
    %684 = vmatpush1.msra.mxu0 0.0
    %685 = vmatprep.subr.mxu0 0.0
    %686 = vmatpush1.msra.mxu0 0.0
    %687 = vmatprep.subr.mxu0 0.0
    %688 = vmatpush1.msra.mxu0 0.0
    %689 = vmatprep.subr.mxu0 0.0
    %690 = vmatpush1.msra.mxu0 0.0
    %691 = vmatprep.subr.mxu0 0.0
    %692 = vmatpush1.msra.mxu0 0.0
    %693 = vmatprep.subr.mxu0 0.0
    %694 = vmatpush1.msra.mxu0 0.0
    %695 = vmatprep.subr.mxu0 0.0
    %696 = vmatpush1.msra.mxu0 0.0
    %697 = vmatprep.subr.mxu0 0.0
    %698 = vmatpush1.msra.mxu0 0.0
    %699 = vmatprep.subr.mxu0 0.0
    %700 = vmatpush1.msra.mxu0 0.0
    %701 = vmatprep.subr.mxu0 0.0
    %702 = vmatpush1.msra.mxu0 0.0
    %703 = vmatprep.subr.mxu0 0.0
    %704 = vmatpush1.msra.mxu0 0.0
    %705 = vmatprep.subr.mxu0 0.0
    %706 = vmatpush1.msra.mxu0 0.0
    %707 = vmatprep.subr.mxu0 0.0
    %708 = vmatpush1.msra.mxu0 0.0
    %709 = vmatprep.subr.mxu0 0.0
    %710 = vmatpush1.msra.mxu0 0.0
    %711 = vmatprep.subr.mxu0 0.0
    %712 = vmatpush1.msra.mxu0 0.0
    %713 = vmatprep.subr.mxu0 0.0
    %714 = vmatpush1.msra.mxu0 0.0
    %715 = vmatprep.subr.mxu0 0.0
    %716 = vmatpush1.msra.mxu0 0.0
    %717 = vmatprep.subr.mxu0 0.0
    %718 = vmatpush1.msra.mxu0 0.0
    %719 = vmatprep.subr.mxu0 0.0
    %720 = vmatpush1.msra.mxu0 0.0
    %721 = vmatprep.mubr.f32.mxu0 0.0
    %722 = vmatmul.mubr.f32.gmra.mrb[0].mxu0 %v655
    %v723 = vpop.f32.mrb[0].mxu0
    %v724 = vadd.f32 %v220, %v723
    %v725 = vpop.f32.mrb[0].mxu0
    %v726 = vadd.f32 %v224, %v725
    %727 = vdwg.mxu0
    %v728 = vxor.u32 %v724, 2147483648
    %v729 = vmul.f32 %v728, 1.442695
    %v730 = vpow.pop %v729
    %v731 = vadd.f32 %v730, 1.0
    %v732 = vrcp.pop %v731
    %v733 = vmul.f32 1.0, %v732
    %v734 = vtanh.pop %v724
    %v735 = vmul.f32 %v733, %v613
    %737 = vrot.lane.b32.xlu0 %v734, 32
    %v738 = vpop.permute.xlu0 %737
    %v740 = vmul.f32 %v733, %v738
    %742 = vrot.lane.b32.xlu0 %v740, 32
    %v743 = vpop.permute.xlu0 %742
    %v745 = vadd.f32 %v735, %v743
    %v746 = vtanh.pop %v745
    %748 = vrot.lane.b32.xlu0 %v746, 32
    %v749 = vpop.permute.xlu0 %748
    %v751 = vmul.f32 %v733, %v749
    %v752 = vadd.f32 %v180, %v726
    %v753 = vxor.u32 %v752, 2147483648
    %v754 = vmul.f32 %v753, 1.442695
    %v755 = vpow.pop %v754
    %v756 = vadd.f32 %v755, 1.0
    %v757 = vrcp.pop %v756
    %v758 = vmul.f32 1.0, %v757
    %v759 = vtanh.pop %v752
    %v760 = vmul.f32 %v758, %v638
    %762 = vrot.lane.b32.xlu0 %v759, 32
    %v763 = vpop.permute.xlu0 %762
    %v765 = vmul.f32 %v758, %v763
    %767 = vrot.lane.b32.xlu0 %v765, 32
    %v768 = vpop.permute.xlu0 %767
    %v770 = vadd.f32 %v760, %v768
    %v771 = vtanh.pop %v770
    %773 = vrot.lane.b32.xlu0 %v771, 32
    %v774 = vpop.permute.xlu0 %773
    %v776 = vmul.f32 %v758, %v774
    %778 = vrot.lane.b32.xlu0 %v776, 64
    %v779 = vpop.permute.xlu0 %778
    %782 = vrot.lane.b32.xlu0 %v751, 96
    %v783 = vpop.permute.xlu0 %782
    %v785 = vsel %vm68, %v779, %v783
    %v787 = vsel %vm257, %v785, 0
    %789 = vmatprep.subr.mxu0 %v199
    %790 = vmatpush1.msra.mxu0 %v198
    %791 = vmatprep.subr.mxu0 %v201
    %792 = vmatpush1.msra.mxu0 %v200
    %793 = vmatprep.subr.mxu0 %v203
    %794 = vmatpush1.msra.mxu0 %v202
    %795 = vmatprep.subr.mxu0 %v205
    %796 = vmatpush1.msra.mxu0 %v204
    %797 = vmatprep.subr.mxu0 %v207
    %798 = vmatpush1.msra.mxu0 %v206
    %799 = vmatprep.subr.mxu0 %v209
    %800 = vmatpush1.msra.mxu0 %v208
    %801 = vmatprep.subr.mxu0 %v211
    %802 = vmatpush1.msra.mxu0 %v210
    %803 = vmatprep.subr.mxu0 %v213
    %804 = vmatpush1.msra.mxu0 %v212
    %805 = vmatprep.subr.mxu0 0.0
    %806 = vmatpush1.msra.mxu0 0.0
    %807 = vmatprep.subr.mxu0 0.0
    %808 = vmatpush1.msra.mxu0 0.0
    %809 = vmatprep.subr.mxu0 0.0
    %810 = vmatpush1.msra.mxu0 0.0
    %811 = vmatprep.subr.mxu0 0.0
    %812 = vmatpush1.msra.mxu0 0.0
    %813 = vmatprep.subr.mxu0 0.0
    %814 = vmatpush1.msra.mxu0 0.0
    %815 = vmatprep.subr.mxu0 0.0
    %816 = vmatpush1.msra.mxu0 0.0
    %817 = vmatprep.subr.mxu0 0.0
    %818 = vmatpush1.msra.mxu0 0.0
    %819 = vmatprep.subr.mxu0 0.0
    %820 = vmatpush1.msra.mxu0 0.0
    %821 = vmatprep.subr.mxu0 0.0
    %822 = vmatpush1.msra.mxu0 0.0
    %823 = vmatprep.subr.mxu0 0.0
    %824 = vmatpush1.msra.mxu0 0.0
    %825 = vmatprep.subr.mxu0 0.0
    %826 = vmatpush1.msra.mxu0 0.0
    %827 = vmatprep.subr.mxu0 0.0
    %828 = vmatpush1.msra.mxu0 0.0
    %829 = vmatprep.subr.mxu0 0.0
    %830 = vmatpush1.msra.mxu0 0.0
    %831 = vmatprep.subr.mxu0 0.0
    %832 = vmatpush1.msra.mxu0 0.0
    %833 = vmatprep.subr.mxu0 0.0
    %834 = vmatpush1.msra.mxu0 0.0
    %835 = vmatprep.subr.mxu0 0.0
    %836 = vmatpush1.msra.mxu0 0.0
    %837 = vmatprep.subr.mxu0 0.0
    %838 = vmatpush1.msra.mxu0 0.0
    %839 = vmatprep.subr.mxu0 0.0
    %840 = vmatpush1.msra.mxu0 0.0
    %841 = vmatprep.subr.mxu0 0.0
    %842 = vmatpush1.msra.mxu0 0.0
    %843 = vmatprep.subr.mxu0 0.0
    %844 = vmatpush1.msra.mxu0 0.0
    %845 = vmatprep.subr.mxu0 0.0
    %846 = vmatpush1.msra.mxu0 0.0
    %847 = vmatprep.subr.mxu0 0.0
    %848 = vmatpush1.msra.mxu0 0.0
    %849 = vmatprep.subr.mxu0 0.0
    %850 = vmatpush1.msra.mxu0 0.0
    %851 = vmatprep.subr.mxu0 0.0
    %852 = vmatpush1.msra.mxu0 0.0
    %853 = vmatprep.mubr.f32.mxu0 0.0
    %854 = vmatmul.mubr.f32.gmra.mrb[0].mxu0 %v787
    %v855 = vpop.f32.mrb[0].mxu0
    %v856 = vadd.f32 %v220, %v855
    %v857 = vpop.f32.mrb[0].mxu0
    %v858 = vadd.f32 %v224, %v857
    %859 = vdwg.mxu0
    %v860 = vxor.u32 %v856, 2147483648
    %v861 = vmul.f32 %v860, 1.442695
    %v862 = vpow.pop %v861
    %v863 = vadd.f32 %v862, 1.0
    %v864 = vrcp.pop %v863
    %v865 = vmul.f32 1.0, %v864
    %v866 = vtanh.pop %v856
    %v867 = vmul.f32 %v865, %v745
    %869 = vrot.lane.b32.xlu0 %v866, 32
    %v870 = vpop.permute.xlu0 %869
    %v872 = vmul.f32 %v865, %v870
    %874 = vrot.lane.b32.xlu0 %v872, 32
    %v875 = vpop.permute.xlu0 %874
    %v877 = vadd.f32 %v867, %v875
    %v878 = vtanh.pop %v877
    %880 = vrot.lane.b32.xlu0 %v878, 32
    %v881 = vpop.permute.xlu0 %880
    %v883 = vmul.f32 %v865, %v881
    %v884 = vadd.f32 %v185, %v858
    %v885 = vxor.u32 %v884, 2147483648
    %v886 = vmul.f32 %v885, 1.442695
    %v887 = vpow.pop %v886
    %v888 = vadd.f32 %v887, 1.0
    %v889 = vrcp.pop %v888
    %v890 = vmul.f32 1.0, %v889
    %v891 = vtanh.pop %v884
    %v892 = vmul.f32 %v890, %v770
    %894 = vrot.lane.b32.xlu0 %v891, 32
    %v895 = vpop.permute.xlu0 %894
    %v897 = vmul.f32 %v890, %v895
    %899 = vrot.lane.b32.xlu0 %v897, 32
    %v900 = vpop.permute.xlu0 %899
    %v902 = vadd.f32 %v892, %v900
    %v903 = vtanh.pop %v902
    %905 = vrot.lane.b32.xlu0 %v903, 32
    %v906 = vpop.permute.xlu0 %905
    %v908 = vmul.f32 %v890, %v906
    %910 = vrot.lane.b32.xlu0 %v908, 64
    %v911 = vpop.permute.xlu0 %910
    %914 = vrot.lane.b32.xlu0 %v883, 96
    %v915 = vpop.permute.xlu0 %914
    %v917 = vsel %vm68, %v911, %v915
    %v919 = vsel %vm257, %v917, 0
    %921 = vmatprep.subr.mxu0 %v199
    %922 = vmatpush1.msra.mxu0 %v198
    %923 = vmatprep.subr.mxu0 %v201
    %924 = vmatpush1.msra.mxu0 %v200
    %925 = vmatprep.subr.mxu0 %v203
    %926 = vmatpush1.msra.mxu0 %v202
    %927 = vmatprep.subr.mxu0 %v205
    %928 = vmatpush1.msra.mxu0 %v204
    %929 = vmatprep.subr.mxu0 %v207
    %930 = vmatpush1.msra.mxu0 %v206
    %931 = vmatprep.subr.mxu0 %v209
    %932 = vmatpush1.msra.mxu0 %v208
    %933 = vmatprep.subr.mxu0 %v211
    %934 = vmatpush1.msra.mxu0 %v210
    %935 = vmatprep.subr.mxu0 %v213
    %936 = vmatpush1.msra.mxu0 %v212
    %937 = vmatprep.subr.mxu0 0.0
    %938 = vmatpush1.msra.mxu0 0.0
    %939 = vmatprep.subr.mxu0 0.0
    %940 = vmatpush1.msra.mxu0 0.0
    %941 = vmatprep.subr.mxu0 0.0
    %942 = vmatpush1.msra.mxu0 0.0
    %943 = vmatprep.subr.mxu0 0.0
    %944 = vmatpush1.msra.mxu0 0.0
    %945 = vmatprep.subr.mxu0 0.0
    %946 = vmatpush1.msra.mxu0 0.0
    %947 = vmatprep.subr.mxu0 0.0
    %948 = vmatpush1.msra.mxu0 0.0
    %949 = vmatprep.subr.mxu0 0.0
    %950 = vmatpush1.msra.mxu0 0.0
    %951 = vmatprep.subr.mxu0 0.0
    %952 = vmatpush1.msra.mxu0 0.0
    %953 = vmatprep.subr.mxu0 0.0
    %954 = vmatpush1.msra.mxu0 0.0
    %955 = vmatprep.subr.mxu0 0.0
    %956 = vmatpush1.msra.mxu0 0.0
    %957 = vmatprep.subr.mxu0 0.0
    %958 = vmatpush1.msra.mxu0 0.0
    %959 = vmatprep.subr.mxu0 0.0
    %960 = vmatpush1.msra.mxu0 0.0
    %961 = vmatprep.subr.mxu0 0.0
    %962 = vmatpush1.msra.mxu0 0.0
    %963 = vmatprep.subr.mxu0 0.0
    %964 = vmatpush1.msra.mxu0 0.0
    %965 = vmatprep.subr.mxu0 0.0
    %966 = vmatpush1.msra.mxu0 0.0
    %967 = vmatprep.subr.mxu0 0.0
    %968 = vmatpush1.msra.mxu0 0.0
    %969 = vmatprep.subr.mxu0 0.0
    %970 = vmatpush1.msra.mxu0 0.0
    %971 = vmatprep.subr.mxu0 0.0
    %972 = vmatpush1.msra.mxu0 0.0
    %973 = vmatprep.subr.mxu0 0.0
    %974 = vmatpush1.msra.mxu0 0.0
    %975 = vmatprep.subr.mxu0 0.0
    %976 = vmatpush1.msra.mxu0 0.0
    %977 = vmatprep.subr.mxu0 0.0
    %978 = vmatpush1.msra.mxu0 0.0
    %979 = vmatprep.subr.mxu0 0.0
    %980 = vmatpush1.msra.mxu0 0.0
    %981 = vmatprep.subr.mxu0 0.0
    %982 = vmatpush1.msra.mxu0 0.0
    %983 = vmatprep.subr.mxu0 0.0
    %984 = vmatpush1.msra.mxu0 0.0
    %985 = vmatprep.mubr.f32.mxu0 0.0
    %986 = vmatmul.mubr.f32.gmra.mrb[0].mxu0 %v919
    %v987 = vpop.f32.mrb[0].mxu0
    %v988 = vadd.f32 %v220, %v987
    %v989 = vpop.f32.mrb[0].mxu0
    %v990 = vadd.f32 %v224, %v989
    %991 = vdwg.mxu0
    %v992 = vxor.u32 %v988, 2147483648
    %v993 = vmul.f32 %v992, 1.442695
    %v994 = vpow.pop %v993
    %v995 = vadd.f32 %v994, 1.0
    %v996 = vrcp.pop %v995
    %v997 = vmul.f32 1.0, %v996
    %v998 = vtanh.pop %v988
    %v999 = vmul.f32 %v997, %v877
    %1001 = vrot.lane.b32.xlu0 %v998, 32
    %v1002 = vpop.permute.xlu0 %1001
    %v1004 = vmul.f32 %v997, %v1002
    %1006 = vrot.lane.b32.xlu0 %v1004, 32
    %v1007 = vpop.permute.xlu0 %1006
    %v1009 = vadd.f32 %v999, %v1007
    %v1010 = vtanh.pop %v1009
    %1012 = vrot.lane.b32.xlu0 %v1010, 32
    %v1013 = vpop.permute.xlu0 %1012
    %v1015 = vmul.f32 %v997, %v1013
    %v1016 = vadd.f32 %v190, %v990
    %v1017 = vxor.u32 %v1016, 2147483648
    %v1018 = vmul.f32 %v1017, 1.442695
    %v1019 = vpow.pop %v1018
    %v1020 = vadd.f32 %v1019, 1.0
    %v1021 = vrcp.pop %v1020
    %v1022 = vmul.f32 1.0, %v1021
    %v1023 = vtanh.pop %v1016
    %v1024 = vmul.f32 %v1022, %v902
    %1026 = vrot.lane.b32.xlu0 %v1023, 32
    %v1027 = vpop.permute.xlu0 %1026
    %v1029 = vmul.f32 %v1022, %v1027
    %1031 = vrot.lane.b32.xlu0 %v1029, 32
    %v1032 = vpop.permute.xlu0 %1031
    %v1034 = vadd.f32 %v1024, %v1032
    %v1035 = vtanh.pop %v1034
    %1037 = vrot.lane.b32.xlu0 %v1035, 32
    %v1038 = vpop.permute.xlu0 %1037
    %v1040 = vmul.f32 %v1022, %v1038
    %1042 = vrot.lane.b32.xlu0 %v1040, 64
    %v1043 = vpop.permute.xlu0 %1042
    %1046 = vrot.lane.b32.xlu0 %v1015, 96
    %v1047 = vpop.permute.xlu0 %1046
    %v1049 = vsel %vm68, %v1043, %v1047
    %v1051 = vsel %vm257, %v1049, 0
    %1053 = vmatprep.subr.mxu0 %v199
    %1054 = vmatpush1.msra.mxu0 %v198
    %1055 = vmatprep.subr.mxu0 %v201
    %1056 = vmatpush1.msra.mxu0 %v200
    %1057 = vmatprep.subr.mxu0 %v203
    %1058 = vmatpush1.msra.mxu0 %v202
    %1059 = vmatprep.subr.mxu0 %v205
    %1060 = vmatpush1.msra.mxu0 %v204
    %1061 = vmatprep.subr.mxu0 %v207
    %1062 = vmatpush1.msra.mxu0 %v206
    %1063 = vmatprep.subr.mxu0 %v209
    %1064 = vmatpush1.msra.mxu0 %v208
    %1065 = vmatprep.subr.mxu0 %v211
    %1066 = vmatpush1.msra.mxu0 %v210
    %1067 = vmatprep.subr.mxu0 %v213
    %1068 = vmatpush1.msra.mxu0 %v212
    %1069 = vmatprep.subr.mxu0 0.0
    %1070 = vmatpush1.msra.mxu0 0.0
    %1071 = vmatprep.subr.mxu0 0.0
    %1072 = vmatpush1.msra.mxu0 0.0
    %1073 = vmatprep.subr.mxu0 0.0
    %1074 = vmatpush1.msra.mxu0 0.0
    %1075 = vmatprep.subr.mxu0 0.0
    %1076 = vmatpush1.msra.mxu0 0.0
    %1077 = vmatprep.subr.mxu0 0.0
    %1078 = vmatpush1.msra.mxu0 0.0
    %1079 = vmatprep.subr.mxu0 0.0
    %1080 = vmatpush1.msra.mxu0 0.0
    %1081 = vmatprep.subr.mxu0 0.0
    %1082 = vmatpush1.msra.mxu0 0.0
    %1083 = vmatprep.subr.mxu0 0.0
    %1084 = vmatpush1.msra.mxu0 0.0
    %1085 = vmatprep.subr.mxu0 0.0
    %1086 = vmatpush1.msra.mxu0 0.0
    %1087 = vmatprep.subr.mxu0 0.0
    %1088 = vmatpush1.msra.mxu0 0.0
    %1089 = vmatprep.subr.mxu0 0.0
    %1090 = vmatpush1.msra.mxu0 0.0
    %1091 = vmatprep.subr.mxu0 0.0
    %1092 = vmatpush1.msra.mxu0 0.0
    %1093 = vmatprep.subr.mxu0 0.0
    %1094 = vmatpush1.msra.mxu0 0.0
    %1095 = vmatprep.subr.mxu0 0.0
    %1096 = vmatpush1.msra.mxu0 0.0
    %1097 = vmatprep.subr.mxu0 0.0
    %1098 = vmatpush1.msra.mxu0 0.0
    %1099 = vmatprep.subr.mxu0 0.0
    %1100 = vmatpush1.msra.mxu0 0.0
    %1101 = vmatprep.subr.mxu0 0.0
    %1102 = vmatpush1.msra.mxu0 0.0
    %1103 = vmatprep.subr.mxu0 0.0
    %1104 = vmatpush1.msra.mxu0 0.0
    %1105 = vmatprep.subr.mxu0 0.0
    %1106 = vmatpush1.msra.mxu0 0.0
    %1107 = vmatprep.subr.mxu0 0.0
    %1108 = vmatpush1.msra.mxu0 0.0
    %1109 = vmatprep.subr.mxu0 0.0
    %1110 = vmatpush1.msra.mxu0 0.0
    %1111 = vmatprep.subr.mxu0 0.0
    %1112 = vmatpush1.msra.mxu0 0.0
    %1113 = vmatprep.subr.mxu0 0.0
    %1114 = vmatpush1.msra.mxu0 0.0
    %1115 = vmatprep.subr.mxu0 0.0
    %1116 = vmatpush1.msra.mxu0 0.0
    %1117 = vmatprep.mubr.f32.mxu0 0.0
    %1118 = vmatmul.mubr.f32.gmra.mrb[0].mxu0 %v1051
    %v1119 = vpop.f32.mrb[0].mxu0
    %v1120 = vadd.f32 %v220, %v1119
    %v1121 = vpop.f32.mrb[0].mxu0
    %v1122 = vadd.f32 %v224, %v1121
    %1123 = vdwg.mxu0
    %v1124 = vxor.u32 %v1120, 2147483648
    %v1125 = vmul.f32 %v1124, 1.442695
    %v1126 = vpow.pop %v1125
    %v1127 = vadd.f32 %v1126, 1.0
    %v1128 = vrcp.pop %v1127
    %v1129 = vmul.f32 1.0, %v1128
    %v1130 = vtanh.pop %v1120
    %v1131 = vmul.f32 %v1129, %v1009
    %1133 = vrot.lane.b32.xlu0 %v1130, 32
    %v1134 = vpop.permute.xlu0 %1133
    %v1136 = vmul.f32 %v1129, %v1134
    %1138 = vrot.lane.b32.xlu0 %v1136, 32
    %v1139 = vpop.permute.xlu0 %1138
    %v1141 = vadd.f32 %v1131, %v1139
    %v1142 = vtanh.pop %v1141
    %1144 = vrot.lane.b32.xlu0 %v1142, 32
    %v1145 = vpop.permute.xlu0 %1144
    %v1147 = vmul.f32 %v1129, %v1145
    %v1148 = vadd.f32 %v195, %v1122
    %v1149 = vxor.u32 %v1148, 2147483648
    %v1150 = vmul.f32 %v1149, 1.442695
    %v1151 = vpow.pop %v1150
    %v1152 = vadd.f32 %v1151, 1.0
    %v1153 = vrcp.pop %v1152
    %v1154 = vmul.f32 1.0, %v1153
    %v1155 = vtanh.pop %v1148
    %v1156 = vmul.f32 %v1154, %v1034
    %1158 = vrot.lane.b32.xlu0 %v1155, 32
    %v1159 = vpop.permute.xlu0 %1158
    %v1161 = vmul.f32 %v1154, %v1159
    %1163 = vrot.lane.b32.xlu0 %v1161, 32
    %v1164 = vpop.permute.xlu0 %1163
    %v1166 = vadd.f32 %v1156, %v1164
    %v1167 = vtanh.pop %v1166
    %1169 = vrot.lane.b32.xlu0 %v1167, 32
    %v1170 = vpop.permute.xlu0 %1169
    %v1172 = vmul.f32 %v1154, %v1170
    %1174 = vrot.lane.b32.xlu0 %v1172, 64
    %v1175 = vpop.permute.xlu0 %1174
    %1178 = vrot.lane.b32.xlu0 %v1147, 96
    %v1179 = vpop.permute.xlu0 %1178
    %v1181 = vsel %vm68, %v1175, %v1179
    %v1183 = vsel %vm257, %v1181, 0
    %1185 = vmatprep.subr.mxu0 %v199
    %1186 = vmatpush1.msra.mxu0 %v198
    %1187 = vmatprep.subr.mxu0 %v201
    %1188 = vmatpush1.msra.mxu0 %v200
    %1189 = vmatprep.subr.mxu0 %v203
    %1190 = vmatpush1.msra.mxu0 %v202
    %1191 = vmatprep.subr.mxu0 %v205
    %1192 = vmatpush1.msra.mxu0 %v204
    %1193 = vmatprep.subr.mxu0 %v207
    %1194 = vmatpush1.msra.mxu0 %v206
    %1195 = vmatprep.subr.mxu0 %v209
    %1196 = vmatpush1.msra.mxu0 %v208
    %1197 = vmatprep.subr.mxu0 %v211
    %1198 = vmatpush1.msra.mxu0 %v210
    %1199 = vmatprep.subr.mxu0 %v213
    %1200 = vmatpush1.msra.mxu0 %v212
    %1201 = vmatprep.subr.mxu0 0.0
    %1202 = vmatpush1.msra.mxu0 0.0
    %1203 = vmatprep.subr.mxu0 0.0
    %1204 = vmatpush1.msra.mxu0 0.0
    %1205 = vmatprep.subr.mxu0 0.0
    %1206 = vmatpush1.msra.mxu0 0.0
    %1207 = vmatprep.subr.mxu0 0.0
    %1208 = vmatpush1.msra.mxu0 0.0
    %1209 = vmatprep.subr.mxu0 0.0
    %1210 = vmatpush1.msra.mxu0 0.0
    %1211 = vmatprep.subr.mxu0 0.0
    %1212 = vmatpush1.msra.mxu0 0.0
    %1213 = vmatprep.subr.mxu0 0.0
    %1214 = vmatpush1.msra.mxu0 0.0
    %1215 = vmatprep.subr.mxu0 0.0
    %1216 = vmatpush1.msra.mxu0 0.0
    %1217 = vmatprep.subr.mxu0 0.0
    %1218 = vmatpush1.msra.mxu0 0.0
    %1219 = vmatprep.subr.mxu0 0.0
    %1220 = vmatpush1.msra.mxu0 0.0
    %1221 = vmatprep.subr.mxu0 0.0
    %1222 = vmatpush1.msra.mxu0 0.0
    %1223 = vmatprep.subr.mxu0 0.0
    %1224 = vmatpush1.msra.mxu0 0.0
    %1225 = vmatprep.subr.mxu0 0.0
    %1226 = vmatpush1.msra.mxu0 0.0
    %1227 = vmatprep.subr.mxu0 0.0
    %1228 = vmatpush1.msra.mxu0 0.0
    %1229 = vmatprep.subr.mxu0 0.0
    %1230 = vmatpush1.msra.mxu0 0.0
    %1231 = vmatprep.subr.mxu0 0.0
    %1232 = vmatpush1.msra.mxu0 0.0
    %1233 = vmatprep.subr.mxu0 0.0
    %1234 = vmatpush1.msra.mxu0 0.0
    %1235 = vmatprep.subr.mxu0 0.0
    %1236 = vmatpush1.msra.mxu0 0.0
    %1237 = vmatprep.subr.mxu0 0.0
    %1238 = vmatpush1.msra.mxu0 0.0
    %1239 = vmatprep.subr.mxu0 0.0
    %1240 = vmatpush1.msra.mxu0 0.0
    %1241 = vmatprep.subr.mxu0 0.0
    %1242 = vmatpush1.msra.mxu0 0.0
    %1243 = vmatprep.subr.mxu0 0.0
    %1244 = vmatpush1.msra.mxu0 0.0
    %1245 = vmatprep.subr.mxu0 0.0
    %1246 = vmatpush1.msra.mxu0 0.0
    %1247 = vmatprep.subr.mxu0 0.0
    %1248 = vmatpush1.msra.mxu0 0.0
    %1249 = vmatprep.mubr.f32.mxu0 0.0
    %1250 = vmatmul.mubr.f32.gmra.mrb[0].mxu0 %v1183
    %v1251 = vpop.f32.mrb[0].mxu0
    %v1252 = vadd.f32 %v220, %v1251
    %v1253 = vpop.f32.mrb[0].mxu0
    %1254 = vdwg.mxu0
    %v1255 = vxor.u32 %v1252, 2147483648
    %v1256 = vmul.f32 %v1255, 1.442695
    %v1257 = vpow.pop %v1256
    %v1258 = vadd.f32 %v1257, 1.0
    %v1259 = vrcp.pop %v1258
    %v1260 = vmul.f32 1.0, %v1259
    %v1261 = vtanh.pop %v1252
    %v1262 = vmul.f32 %v1260, %v1141
    %1264 = vrot.lane.b32.xlu0 %v1261, 32
    %v1265 = vpop.permute.xlu0 %1264
    %v1267 = vmul.f32 %v1260, %v1265
    %1269 = vrot.lane.b32.xlu0 %v1267, 32
    %v1270 = vpop.permute.xlu0 %1269
    %v1272 = vadd.f32 %v1262, %v1270
    %v1273 = vtanh.pop %v1272
    %1275 = vrot.lane.b32.xlu0 %v1273, 32
    %v1276 = vpop.permute.xlu0 %1275
    %v1278 = vmul.f32 %v1260, %v1276
    %1280 = vrot.lane.b32.xlu0 %v1272, 64
    %v1281 = vpop.permute.xlu0 %1280
    %v1283 = vsel %vm68, %v1175, %v1166
    %v1284 = vsel %vm257, %v1283, %v1278
    %vm1285 = vcmask 785408
    %v1286 = vsel %vm1285, %v1284, %v1281
    %v1287 = vtanh.pop %v1286
    %v1288 = vld [vmem:[#allocation2 + $0x20] sm:$0xff]
    %v1289 = vld [vmem:[#allocation2 + $0x28] sm:$0xff]
    %v1290 = vld [vmem:[#allocation2 + $0x30] sm:$0xff]
    %v1291 = vld [vmem:[#allocation2 + $0x38] sm:$0xff]
    %v1292 = vld [vmem:[#allocation2 + $0x40] sm:$0xff]
    %v1293 = vld [vmem:[#allocation2 + $0x48] sm:$0xff]
    %v1294 = vld [vmem:[#allocation2 + $0x50] sm:$0xff]
    %v1295 = vld [vmem:[#allocation2 + $0x58] sm:$0xff]
    %v1296 = vld [vmem:[#allocation2 + $0x60] sm:$0xff]
    %v1297 = vld [vmem:[#allocation2 + $0x68] sm:$0xff]
    %v1298 = vld [vmem:[#allocation2 + $0x70] sm:$0xff]
    %v1299 = vld [vmem:[#allocation2 + $0x78] sm:$0xff]
    %v1300 = vld [vmem:[#allocation2 + $0x80] sm:$0xff]
    %v1301 = vld [vmem:[#allocation2 + $0x88] sm:$0xff]
    %v1302 = vld [vmem:[#allocation2 + $0x90] sm:$0xff]
    %v1303 = vld [vmem:[#allocation2 + $0x98] sm:$0xff]
    %v1304 = vld [vmem:[#allocation2 + $0xa1] sm:$0x1]
    %v1305 = vlaneseq
    %v1306 = vshrl.u32 %v1305, 7
    %v1307 = vsub.s32 0, %v1306
    %v1308 = vrot.slane %v1304, %v1307
    %1309 = vmatprep.subr.mxu0 0.0
    %1310 = vmatpush1.msra.mxu0 %v1288
    %1311 = vmatprep.subr.mxu0 0.0
    %1312 = vmatpush1.msra.mxu0 %v1289
    %1313 = vmatprep.subr.mxu0 0.0
    %1314 = vmatpush1.msra.mxu0 %v1290
    %1315 = vmatprep.subr.mxu0 0.0
    %1316 = vmatpush1.msra.mxu0 %v1291
    %1317 = vmatprep.subr.mxu0 0.0
    %1318 = vmatpush1.msra.mxu0 %v1292
    %1319 = vmatprep.subr.mxu0 0.0
    %1320 = vmatpush1.msra.mxu0 %v1293
    %1321 = vmatprep.subr.mxu0 0.0
    %1322 = vmatpush1.msra.mxu0 %v1294
    %1323 = vmatprep.subr.mxu0 0.0
    %1324 = vmatpush1.msra.mxu0 %v1295
    %1325 = vmatprep.subr.mxu0 0.0
    %1326 = vmatpush1.msra.mxu0 %v1296
    %1327 = vmatprep.subr.mxu0 0.0
    %1328 = vmatpush1.msra.mxu0 %v1297
    %1329 = vmatprep.subr.mxu0 0.0
    %1330 = vmatpush1.msra.mxu0 %v1298
    %1331 = vmatprep.subr.mxu0 0.0
    %1332 = vmatpush1.msra.mxu0 %v1299
    %1333 = vmatprep.subr.mxu0 0.0
    %1334 = vmatpush1.msra.mxu0 %v1300
    %1335 = vmatprep.subr.mxu0 0.0
    %1336 = vmatpush1.msra.mxu0 %v1301
    %1337 = vmatprep.subr.mxu0 0.0
    %1338 = vmatpush1.msra.mxu0 %v1302
    %1339 = vmatprep.subr.mxu0 0.0
    %1340 = vmatpush1.msra.mxu0 %v1303
    %1341 = vmatprep.subr.mxu0 0.0
    %1342 = vmatpush1.msra.mxu0 0.0
    %1343 = vmatprep.subr.mxu0 0.0
    %1344 = vmatpush1.msra.mxu0 0.0
    %1345 = vmatprep.subr.mxu0 0.0
    %1346 = vmatpush1.msra.mxu0 0.0
    %1347 = vmatprep.subr.mxu0 0.0
    %1348 = vmatpush1.msra.mxu0 0.0
    %1349 = vmatprep.subr.mxu0 0.0
    %1350 = vmatpush1.msra.mxu0 0.0
    %1351 = vmatprep.subr.mxu0 0.0
    %1352 = vmatpush1.msra.mxu0 0.0
    %1353 = vmatprep.subr.mxu0 0.0
    %1354 = vmatpush1.msra.mxu0 0.0
    %1355 = vmatprep.subr.mxu0 0.0
    %1356 = vmatpush1.msra.mxu0 0.0
    %1357 = vmatprep.subr.mxu0 0.0
    %1358 = vmatpush1.msra.mxu0 0.0
    %1359 = vmatprep.subr.mxu0 0.0
    %1360 = vmatpush1.msra.mxu0 0.0
    %1361 = vmatprep.subr.mxu0 0.0
    %1362 = vmatpush1.msra.mxu0 0.0
    %1363 = vmatprep.subr.mxu0 0.0
    %1364 = vmatpush1.msra.mxu0 0.0
    %1365 = vmatprep.subr.mxu0 0.0
    %1366 = vmatpush1.msra.mxu0 0.0
    %1367 = vmatprep.subr.mxu0 0.0
    %1368 = vmatpush1.msra.mxu0 0.0
    %1369 = vmatprep.subr.mxu0 0.0
    %1370 = vmatpush1.msra.mxu0 0.0
    %1371 = vmatprep.subr.mxu0 0.0
    %1372 = vmatpush1.msra.mxu0 0.0
    %1373 = vmatprep.mubr.f32.mxu0 0.0
    %1374 = vmatmul.mubr.f32.gmra.mrb[0].mxu0 %v1287
    %v1375 = vpop.f32.mrb[0].mxu0
    %v1376 = vadd.f32 %v1308, %v1375
    %v1377 = vpop.f32.mrb[0].mxu0
    %1378 = vdwg.mxu0
    %1379 = vst [vmem:[#allocation7] sm:$0xff] %v1376
    // Predicated region
    $region22: #{tpu_custom_call.1} parent=1 // pred_check
      _
    $region23: #{tpu_custom_call.1} parent=1 // pred_check_branch
      %1381 = sbr.rel (0) target = $region25
    $region24: #{tpu_custom_call.1} parent=1 // pred_region
      %s1383 = ssub.s32 128, 128
      %1384 = vsyncadd [#allocation4], %s1383
      %s1386 = sshll.u32 [#allocation7], 4
      %s1387 = int_to_ptr.vmem [resolvable:$true] %s1386
      %1389 = dma.vmem_to_hbm [thread:$0]  %s1387, 128, %s3, [#allocation4]
    $region25: #{tpu_custom_call.1} parent=1 // pred_fallthru
      _
    // Predicated region
    $region26: #{tpu_custom_call.1} parent=1 // pred_check
      _
    $region27: #{tpu_custom_call.1} parent=1 // pred_check_branch
      %1391 = sbr.rel (0) target = $region29
    $region28: #{tpu_custom_call.1} parent=1 // pred_region
      %1392 = dma.done [#allocation4], 128
    $region29: #{tpu_custom_call.1} parent=1 // pred_fallthru
      _
    %1393 = vsyncpa [#allocation3], 1
    %1394 = vsyncpa [#allocation6], 1
    %1395 = vsyncpa [#allocation4], 1

</llo_original>
